<compile_context>
chip_gen: v5e
topology: v5e:2x2
jax: 0.10.0
libtpu: 0.0.40
codegen_flags: <defaults>
</compile_context>

<pallas_src>
import functools

import jax
import jax.numpy as jnp
from jax import lax
from jax.experimental import pallas as pl
from jax.experimental.pallas import tpu as pltpu


def basic_block_kernel(H, x_ref, w_ref, b_ref, out_ref):
    """x_ref/out_ref: (BN*H, W*C) f32; w_ref: (3, 3, WC, WC) bf16; b_ref: (3, WC) f32."""
    M, WC = out_ref.shape
    x = x_ref[...]                                          # (M, WC) f32

    # Per-image H-boundary masks: after a sublane roll, rows wrap across image
    # boundaries inside the slab, so the first/last row of every image must be
    # replaced by the zero padding row. Computed once, reused by all 3 convs.
    row = lax.broadcasted_iota(jnp.int32, (M, WC), 0)
    top_edge = (row % H) == 0                               # row above is padding
    bot_edge = (row % H) == (H - 1)                         # row below is padding

    def conv(idx, act, relu):
        # H-shifted views via XLU rolls + boundary zero mask (no halo scratch).
        up = jnp.where(top_edge, 0.0, pltpu.roll(act, 1, axis=0))       # act[h-1]
        down = jnp.where(bot_edge, 0.0, pltpu.roll(act, M - 1, axis=0))  # act[h+1]
        # Three accumulating matmuls, one per kh tap (W-conv folded into the
        # block-banded weight blocks). bf16 operands, f32 accumulation.
        y = jnp.dot(up.astype(jnp.bfloat16), w_ref[idx, 0],
                    preferred_element_type=jnp.float32)
        y = y + jnp.dot(act.astype(jnp.bfloat16), w_ref[idx, 1],
                        preferred_element_type=jnp.float32)
        y = y + jnp.dot(down.astype(jnp.bfloat16), w_ref[idx, 2],
                        preferred_element_type=jnp.float32)
        y = y + b_ref[idx:idx + 1, :]                       # f32 bias add
        return jnp.maximum(y, 0.0) if relu else y

    y = conv(0, x, True)
    y = conv(1, y, True)
    y = conv(2, y, False)
    out_ref[...] = (y + x).astype(out_ref.dtype)            # identity shortcut


def _build_kh_blocks(w_hwio, W):
    """(3, 3, Cin, Cout) HWIO -> (3, W*Cin, W*Cout) block-banded matrices.

    For kh block: row w_in*Cin + cin, column w_out*Cout + cout holds
    w[kh, kw, cin, cout] with kw = w_in - w_out + 1; taps outside [0, 3) are
    absent, which implements the zero-padding along W.
    """
    KH, KW, Cin, Cout = w_hwio.shape
    blocks = []
    for kh in range(KH):
        m = jnp.zeros((W * Cin, W * Cout), w_hwio.dtype)
        for kw in range(KW):
            band = jnp.eye(W, W, k=1 - kw, dtype=w_hwio.dtype)   # (W, W)
            m = m + jnp.kron(band, w_hwio[kh, kw])
        blocks.append(m)
    return jnp.stack(blocks)                                # (3, W*Cin, W*Cout)


def prepare_params(w1, b1, w2, b2, w3, b3, W):
    """Stack the 3 convs: (3, 3, W*C, W*C) bf16 weights and (3, W*C) f32 biases."""
    wmats = jnp.stack([_build_kh_blocks(w, W) for w in (w1, w2, w3)])
    biases = jnp.stack([jnp.tile(b, W) for b in (b1, b2, b3)])
    return wmats.astype(jnp.bfloat16), biases.astype(jnp.float32)


def _pick_bn(N, H, target_m=128):
    """Largest BN dividing N with BN*H >= target_m when possible (capped at N)."""
    bn = max(1, min(N, -(-target_m // H)))
    while N % bn:
        bn -= 1
    return bn


@jax.jit
def basic_block(x_nhwc, wmats, biases):
    """x_nhwc: (N, H, W, C) f32; wmats: (3, 3, W*C, W*C) bf16; biases: (3, W*C) f32."""
    N, H, W, C = x_nhwc.shape
    WC = W * C
    bn = _pick_bn(N, H)                                     # BN images per grid step
    M = bn * H                                              # matmul M dimension
    x2 = x_nhwc.reshape(N * H, WC)                          # free: merges contiguous dims

    kernel = functools.partial(basic_block_kernel, H)
    out2 = pl.pallas_call(
        kernel,
        out_shape=jax.ShapeDtypeStruct((N * H, WC), x_nhwc.dtype),
        grid_spec=pltpu.PrefetchScalarGridSpec(
            num_scalar_prefetch=0,
            grid=(N // bn,),
            in_specs=[
                pl.BlockSpec((M, WC), lambda n: (n, 0)),
                pl.BlockSpec((3, 3, WC, WC), lambda n: (0, 0, 0, 0)),
                pl.BlockSpec((3, WC), lambda n: (0, 0)),
            ],
            out_specs=pl.BlockSpec((M, WC), lambda n: (n, 0)),
        ),
        compiler_params=pltpu.CompilerParams(
            dimension_semantics=("parallel",)),
    )(x2, wmats, biases)
    return out2.reshape(N, H, W, C)


def _reference(x_nhwc, w1, b1, w2, b2, w3, b3):
    """Plain-JAX reference (NHWC/HWIO), mirrors the PyTorch forward."""
    def conv(x, w, b):
        y = lax.conv_general_dilated(
            x, w, window_strides=(1, 1), padding=((1, 1), (1, 1)),
            dimension_numbers=("NHWC", "HWIO", "NHWC"))
        return y + b.reshape(1, 1, 1, -1)

    y = jax.nn.relu(conv(x_nhwc, w1, b1))
    y = jax.nn.relu(conv(y, w2, b2))
    y = conv(y, w3, b3)
    return y + x_nhwc


if __name__ == "__main__":
    # Small shapes: channels=8 (in == out so identity shortcut adds), 16x16
    # spatial, stride=1.  Batch=32 so BN=8 images fold into each grid step:
    # M = 8*16 = 128 MXU rows, grid = (4,) (even, >=2 steps per v7x core).
    N, C, Hdim, Wdim = 32, 8, 16, 16

    key = jax.random.PRNGKey(0)
    kx, k1, k2, k3, kb1, kb2, kb3 = jax.random.split(key, 7)

    # PyTorch-style NCHW input, moved to NHWC for the kernel.
    x_nchw = jax.random.normal(kx, (N, C, Hdim, Wdim), dtype=jnp.float32)
    x_nhwc = jnp.transpose(x_nchw, (0, 2, 3, 1))

    # Conv weights in PyTorch OIHW (out, in, kh, kw), bias (out,); converted
    # to HWIO for the NHWC kernel / reference.
    scale = 0.1
    w1_oihw = scale * jax.random.normal(k1, (C, C, 3, 3), dtype=jnp.float32)
    w2_oihw = scale * jax.random.normal(k2, (C, C, 3, 3), dtype=jnp.float32)
    w3_oihw = scale * jax.random.normal(k3, (C, C, 3, 3), dtype=jnp.float32)
    b1 = scale * jax.random.normal(kb1, (C,), dtype=jnp.float32)
    b2 = scale * jax.random.normal(kb2, (C,), dtype=jnp.float32)
    b3 = scale * jax.random.normal(kb3, (C,), dtype=jnp.float32)

    def oihw_to_hwio(w):
        return jnp.transpose(w, (2, 3, 1, 0))

    w1, w2, w3 = map(oihw_to_hwio, (w1_oihw, w2_oihw, w3_oihw))

    wmats, biases = prepare_params(w1, b1, w2, b2, w3, b3, Wdim)

    out = basic_block(x_nhwc, wmats, biases)
    out = jax.block_until_ready(out)

    ref = _reference(x_nhwc, w1, b1, w2, b2, w3, b3)
    assert out.shape == (N, Hdim, Wdim, C)
    # Tolerance accounts for bf16 matmul operands across three chained convs
    # (f32 accumulation; bias/ReLU/residual stay f32).
    assert jnp.allclose(out, ref, atol=5e-2, rtol=5e-2), "mismatch vs reference"

    print("KERNEL_OK")
</pallas_src>

<mosaic_0001>
module attributes {stable_mosaic.version = 11 : i64} {
  func.func @basic_block_kernel(%arg0: i32, %arg1: memref<128x128xf32, #tpu.memory_space<vmem>>, %arg2: memref<3x3x128x128xbf16, #tpu.memory_space<vmem>>, %arg3: memref<3x128xf32, #tpu.memory_space<vmem>>, %arg4: memref<128x128xf32, #tpu.memory_space<vmem>>) attributes {dimension_semantics = [#tpu.dimension_semantics<parallel>], iteration_bounds = array<i64: 4>, scalar_prefetch = 0 : i64, scratch_operands = 0 : i64, tpu.core_type = #tpu.core_type<tc>, window_params = [{transform_indices = @transform_0, window_bounds = array<i64: 128, 128>}, {pipeline_mode = #tpu.pipeline_mode<synchronous>, transform_indices = @transform_1, window_bounds = array<i64: 3, 3, 128, 128>}, {pipeline_mode = #tpu.pipeline_mode<synchronous>, transform_indices = @transform_2, window_bounds = array<i64: 3, 128>}, {transform_indices = @transform_3, window_bounds = array<i64: 128, 128>}]} {
    %c0 = arith.constant 0 : index
    %c0_0 = arith.constant 0 : index
    %0 = vector.load %arg1[%c0, %c0_0] : memref<128x128xf32, #tpu.memory_space<vmem>>, vector<128x128xf32>
    %1 = tpu.iota {dimensions = array<i32: 0>} : vector<128x128xi32>
    %c16_i32 = arith.constant 16 : i32
    %c0_i32 = arith.constant 0 : i32
    %2 = arith.cmpi eq, %c16_i32, %c0_i32 : i32
    %c1_i32 = arith.constant 1 : i32
    %3 = arith.select %2, %c1_i32, %c16_i32 : i32
    %4 = vector.broadcast %3 : i32 to vector<128x128xi32>
    %5 = arith.remsi %1, %4 : vector<128x128xi32>
    %c0_i32_1 = arith.constant 0 : i32
    %6 = vector.broadcast %c0_i32_1 : i32 to vector<128x128xi32>
    %7 = arith.cmpi ne, %5, %6 : vector<128x128xi32>
    %c0_i32_2 = arith.constant 0 : i32
    %8 = vector.broadcast %c0_i32_2 : i32 to vector<128x128xi32>
    %9 = arith.cmpi slt, %5, %8 : vector<128x128xi32>
    %c0_i32_3 = arith.constant 0 : i32
    %10 = arith.cmpi slt, %3, %c0_i32_3 : i32
    %11 = vector.broadcast %10 : i1 to vector<128x128xi1>
    %12 = vector.broadcast %11 : vector<128x128xi1> to vector<128x128xi1>
    %13 = arith.xori %9, %12 : vector<128x128xi1>
    %14 = arith.andi %13, %7 : vector<128x128xi1>
    %15 = vector.broadcast %3 : i32 to vector<128x128xi32>
    %16 = arith.addi %5, %15 : vector<128x128xi32>
    %17 = arith.select %14, %16, %5 : vector<128x128xi1>, vector<128x128xi32>
    %c0_i32_4 = arith.constant 0 : i32
    %18 = vector.broadcast %c0_i32_4 : i32 to vector<128x128xi32>
    %19 = arith.cmpi eq, %17, %18 : vector<128x128xi32>
    %c16_i32_5 = arith.constant 16 : i32
    %c0_i32_6 = arith.constant 0 : i32
    %20 = arith.cmpi eq, %c16_i32_5, %c0_i32_6 : i32
    %c1_i32_7 = arith.constant 1 : i32
    %21 = arith.select %20, %c1_i32_7, %c16_i32_5 : i32
    %22 = vector.broadcast %21 : i32 to vector<128x128xi32>
    %23 = arith.remsi %1, %22 : vector<128x128xi32>
    %c0_i32_8 = arith.constant 0 : i32
    %24 = vector.broadcast %c0_i32_8 : i32 to vector<128x128xi32>
    %25 = arith.cmpi ne, %23, %24 : vector<128x128xi32>
    %c0_i32_9 = arith.constant 0 : i32
    %26 = vector.broadcast %c0_i32_9 : i32 to vector<128x128xi32>
    %27 = arith.cmpi slt, %23, %26 : vector<128x128xi32>
    %c0_i32_10 = arith.constant 0 : i32
    %28 = arith.cmpi slt, %21, %c0_i32_10 : i32
    %29 = vector.broadcast %28 : i1 to vector<128x128xi1>
    %30 = vector.broadcast %29 : vector<128x128xi1> to vector<128x128xi1>
    %31 = arith.xori %27, %30 : vector<128x128xi1>
    %32 = arith.andi %31, %25 : vector<128x128xi1>
    %33 = vector.broadcast %21 : i32 to vector<128x128xi32>
    %34 = arith.addi %23, %33 : vector<128x128xi32>
    %35 = arith.select %32, %34, %23 : vector<128x128xi1>, vector<128x128xi32>
    %c15_i32 = arith.constant 15 : i32
    %36 = vector.broadcast %c15_i32 : i32 to vector<128x128xi32>
    %37 = arith.cmpi eq, %35, %36 : vector<128x128xi32>
    %c1_i32_11 = arith.constant 1 : i32
    %38 = tpu.dynamic_rotate %0 by %c1_i32_11 dim 0 : vector<128x128xf32>, i32 -> vector<128x128xf32>
    %cst = arith.constant 0.000000e+00 : f32
    %39 = vector.broadcast %cst : f32 to vector<128x128xf32>
    %40 = arith.select %19, %39, %38 : vector<128x128xi1>, vector<128x128xf32>
    %c127_i32 = arith.constant 127 : i32
    %41 = tpu.dynamic_rotate %0 by %c127_i32 dim 0 : vector<128x128xf32>, i32 -> vector<128x128xf32>
    %cst_12 = arith.constant 0.000000e+00 : f32
    %42 = vector.broadcast %cst_12 : f32 to vector<128x128xf32>
    %43 = arith.select %37, %42, %41 : vector<128x128xi1>, vector<128x128xf32>
    %44 = arith.truncf %40 : vector<128x128xf32> to vector<128x128xbf16>
    %c0_13 = arith.constant 0 : index
    %c0_14 = arith.constant 0 : index
    %c0_15 = arith.constant 0 : index
    %c0_16 = arith.constant 0 : index
    %45 = vector.load %arg2[%c0_13, %c0_14, %c0_15, %c0_16] : memref<3x3x128x128xbf16, #tpu.memory_space<vmem>>, vector<1x1x128x128xbf16>
    %46 = vector.shape_cast %45 : vector<1x1x128x128xbf16> to vector<128x128xbf16>
    %cst_17 = arith.constant dense<0.000000e+00> : vector<128x128xf32>
    %47 = tpu.matmul %44, %46, %cst_17 {dimension_numbers = #tpu.dot_dimension_numbers<[1], [0], [0], [1], [0, 0, 1, 1], [], []>} : vector<128x128xbf16>, vector<128x128xbf16>, vector<128x128xf32> -> vector<128x128xf32>
    %48 = arith.truncf %0 : vector<128x128xf32> to vector<128x128xbf16>
    %c0_18 = arith.constant 0 : index
    %c1 = arith.constant 1 : index
    %c0_19 = arith.constant 0 : index
    %c0_20 = arith.constant 0 : index
    %49 = vector.load %arg2[%c0_18, %c1, %c0_19, %c0_20] : memref<3x3x128x128xbf16, #tpu.memory_space<vmem>>, vector<1x1x128x128xbf16>
    %50 = vector.shape_cast %49 : vector<1x1x128x128xbf16> to vector<128x128xbf16>
    %cst_21 = arith.constant dense<0.000000e+00> : vector<128x128xf32>
    %51 = tpu.matmul %48, %50, %cst_21 {dimension_numbers = #tpu.dot_dimension_numbers<[1], [0], [0], [1], [0, 0, 1, 1], [], []>} : vector<128x128xbf16>, vector<128x128xbf16>, vector<128x128xf32> -> vector<128x128xf32>
    %52 = arith.addf %47, %51 : vector<128x128xf32>
    %53 = arith.truncf %43 : vector<128x128xf32> to vector<128x128xbf16>
    %c0_22 = arith.constant 0 : index
    %c2 = arith.constant 2 : index
    %c0_23 = arith.constant 0 : index
    %c0_24 = arith.constant 0 : index
    %54 = vector.load %arg2[%c0_22, %c2, %c0_23, %c0_24] : memref<3x3x128x128xbf16, #tpu.memory_space<vmem>>, vector<1x1x128x128xbf16>
    %55 = vector.shape_cast %54 : vector<1x1x128x128xbf16> to vector<128x128xbf16>
    %cst_25 = arith.constant dense<0.000000e+00> : vector<128x128xf32>
    %56 = tpu.matmul %53, %55, %cst_25 {dimension_numbers = #tpu.dot_dimension_numbers<[1], [0], [0], [1], [0, 0, 1, 1], [], []>} : vector<128x128xbf16>, vector<128x128xbf16>, vector<128x128xf32> -> vector<128x128xf32>
    %57 = arith.addf %52, %56 : vector<128x128xf32>
    %c0_26 = arith.constant 0 : index
    %c0_27 = arith.constant 0 : index
    %58 = vector.load %arg3[%c0_26, %c0_27] : memref<3x128xf32, #tpu.memory_space<vmem>>, vector<1x128xf32>
    %59 = vector.broadcast %58 : vector<1x128xf32> to vector<128x128xf32>
    %60 = arith.addf %57, %59 : vector<128x128xf32>
    %cst_28 = arith.constant 0.000000e+00 : f32
    %61 = vector.broadcast %cst_28 : f32 to vector<128x128xf32>
    %62 = arith.maximumf %60, %61 : vector<128x128xf32>
    %c1_i32_29 = arith.constant 1 : i32
    %63 = tpu.dynamic_rotate %62 by %c1_i32_29 dim 0 : vector<128x128xf32>, i32 -> vector<128x128xf32>
    %cst_30 = arith.constant 0.000000e+00 : f32
    %64 = vector.broadcast %cst_30 : f32 to vector<128x128xf32>
    %65 = arith.select %19, %64, %63 : vector<128x128xi1>, vector<128x128xf32>
    %c127_i32_31 = arith.constant 127 : i32
    %66 = tpu.dynamic_rotate %62 by %c127_i32_31 dim 0 : vector<128x128xf32>, i32 -> vector<128x128xf32>
    %cst_32 = arith.constant 0.000000e+00 : f32
    %67 = vector.broadcast %cst_32 : f32 to vector<128x128xf32>
    %68 = arith.select %37, %67, %66 : vector<128x128xi1>, vector<128x128xf32>
    %69 = arith.truncf %65 : vector<128x128xf32> to vector<128x128xbf16>
    %c1_33 = arith.constant 1 : index
    %c0_34 = arith.constant 0 : index
    %c0_35 = arith.constant 0 : index
    %c0_36 = arith.constant 0 : index
    %70 = vector.load %arg2[%c1_33, %c0_34, %c0_35, %c0_36] : memref<3x3x128x128xbf16, #tpu.memory_space<vmem>>, vector<1x1x128x128xbf16>
    %71 = vector.shape_cast %70 : vector<1x1x128x128xbf16> to vector<128x128xbf16>
    %cst_37 = arith.constant dense<0.000000e+00> : vector<128x128xf32>
    %72 = tpu.matmul %69, %71, %cst_37 {dimension_numbers = #tpu.dot_dimension_numbers<[1], [0], [0], [1], [0, 0, 1, 1], [], []>} : vector<128x128xbf16>, vector<128x128xbf16>, vector<128x128xf32> -> vector<128x128xf32>
    %73 = arith.truncf %62 : vector<128x128xf32> to vector<128x128xbf16>
    %c1_38 = arith.constant 1 : index
    %c1_39 = arith.constant 1 : index
    %c0_40 = arith.constant 0 : index
    %c0_41 = arith.constant 0 : index
    %74 = vector.load %arg2[%c1_38, %c1_39, %c0_40, %c0_41] : memref<3x3x128x128xbf16, #tpu.memory_space<vmem>>, vector<1x1x128x128xbf16>
    %75 = vector.shape_cast %74 : vector<1x1x128x128xbf16> to vector<128x128xbf16>
    %cst_42 = arith.constant dense<0.000000e+00> : vector<128x128xf32>
    %76 = tpu.matmul %73, %75, %cst_42 {dimension_numbers = #tpu.dot_dimension_numbers<[1], [0], [0], [1], [0, 0, 1, 1], [], []>} : vector<128x128xbf16>, vector<128x128xbf16>, vector<128x128xf32> -> vector<128x128xf32>
    %77 = arith.addf %72, %76 : vector<128x128xf32>
    %78 = arith.truncf %68 : vector<128x128xf32> to vector<128x128xbf16>
    %c1_43 = arith.constant 1 : index
    %c2_44 = arith.constant 2 : index
    %c0_45 = arith.constant 0 : index
    %c0_46 = arith.constant 0 : index
    %79 = vector.load %arg2[%c1_43, %c2_44, %c0_45, %c0_46] : memref<3x3x128x128xbf16, #tpu.memory_space<vmem>>, vector<1x1x128x128xbf16>
    %80 = vector.shape_cast %79 : vector<1x1x128x128xbf16> to vector<128x128xbf16>
    %cst_47 = arith.constant dense<0.000000e+00> : vector<128x128xf32>
    %81 = tpu.matmul %78, %80, %cst_47 {dimension_numbers = #tpu.dot_dimension_numbers<[1], [0], [0], [1], [0, 0, 1, 1], [], []>} : vector<128x128xbf16>, vector<128x128xbf16>, vector<128x128xf32> -> vector<128x128xf32>
    %82 = arith.addf %77, %81 : vector<128x128xf32>
    %c1_48 = arith.constant 1 : index
    %c0_49 = arith.constant 0 : index
    %83 = vector.load %arg3[%c1_48, %c0_49] : memref<3x128xf32, #tpu.memory_space<vmem>>, vector<1x128xf32>
    %84 = vector.broadcast %83 : vector<1x128xf32> to vector<128x128xf32>
    %85 = arith.addf %82, %84 : vector<128x128xf32>
    %cst_50 = arith.constant 0.000000e+00 : f32
    %86 = vector.broadcast %cst_50 : f32 to vector<128x128xf32>
    %87 = arith.maximumf %85, %86 : vector<128x128xf32>
    %c1_i32_51 = arith.constant 1 : i32
    %88 = tpu.dynamic_rotate %87 by %c1_i32_51 dim 0 : vector<128x128xf32>, i32 -> vector<128x128xf32>
    %cst_52 = arith.constant 0.000000e+00 : f32
    %89 = vector.broadcast %cst_52 : f32 to vector<128x128xf32>
    %90 = arith.select %19, %89, %88 : vector<128x128xi1>, vector<128x128xf32>
    %c127_i32_53 = arith.constant 127 : i32
    %91 = tpu.dynamic_rotate %87 by %c127_i32_53 dim 0 : vector<128x128xf32>, i32 -> vector<128x128xf32>
    %cst_54 = arith.constant 0.000000e+00 : f32
    %92 = vector.broadcast %cst_54 : f32 to vector<128x128xf32>
    %93 = arith.select %37, %92, %91 : vector<128x128xi1>, vector<128x128xf32>
    %94 = arith.truncf %90 : vector<128x128xf32> to vector<128x128xbf16>
    %c2_55 = arith.constant 2 : index
    %c0_56 = arith.constant 0 : index
    %c0_57 = arith.constant 0 : index
    %c0_58 = arith.constant 0 : index
    %95 = vector.load %arg2[%c2_55, %c0_56, %c0_57, %c0_58] : memref<3x3x128x128xbf16, #tpu.memory_space<vmem>>, vector<1x1x128x128xbf16>
    %96 = vector.shape_cast %95 : vector<1x1x128x128xbf16> to vector<128x128xbf16>
    %cst_59 = arith.constant dense<0.000000e+00> : vector<128x128xf32>
    %97 = tpu.matmul %94, %96, %cst_59 {dimension_numbers = #tpu.dot_dimension_numbers<[1], [0], [0], [1], [0, 0, 1, 1], [], []>} : vector<128x128xbf16>, vector<128x128xbf16>, vector<128x128xf32> -> vector<128x128xf32>
    %98 = arith.truncf %87 : vector<128x128xf32> to vector<128x128xbf16>
    %c2_60 = arith.constant 2 : index
    %c1_61 = arith.constant 1 : index
    %c0_62 = arith.constant 0 : index
    %c0_63 = arith.constant 0 : index
    %99 = vector.load %arg2[%c2_60, %c1_61, %c0_62, %c0_63] : memref<3x3x128x128xbf16, #tpu.memory_space<vmem>>, vector<1x1x128x128xbf16>
    %100 = vector.shape_cast %99 : vector<1x1x128x128xbf16> to vector<128x128xbf16>
    %cst_64 = arith.constant dense<0.000000e+00> : vector<128x128xf32>
    %101 = tpu.matmul %98, %100, %cst_64 {dimension_numbers = #tpu.dot_dimension_numbers<[1], [0], [0], [1], [0, 0, 1, 1], [], []>} : vector<128x128xbf16>, vector<128x128xbf16>, vector<128x128xf32> -> vector<128x128xf32>
    %102 = arith.addf %97, %101 : vector<128x128xf32>
    %103 = arith.truncf %93 : vector<128x128xf32> to vector<128x128xbf16>
    %c2_65 = arith.constant 2 : index
    %c2_66 = arith.constant 2 : index
    %c0_67 = arith.constant 0 : index
    %c0_68 = arith.constant 0 : index
    %104 = vector.load %arg2[%c2_65, %c2_66, %c0_67, %c0_68] : memref<3x3x128x128xbf16, #tpu.memory_space<vmem>>, vector<1x1x128x128xbf16>
    %105 = vector.shape_cast %104 : vector<1x1x128x128xbf16> to vector<128x128xbf16>
    %cst_69 = arith.constant dense<0.000000e+00> : vector<128x128xf32>
    %106 = tpu.matmul %103, %105, %cst_69 {dimension_numbers = #tpu.dot_dimension_numbers<[1], [0], [0], [1], [0, 0, 1, 1], [], []>} : vector<128x128xbf16>, vector<128x128xbf16>, vector<128x128xf32> -> vector<128x128xf32>
    %107 = arith.addf %102, %106 : vector<128x128xf32>
    %c2_70 = arith.constant 2 : index
    %c0_71 = arith.constant 0 : index
    %108 = vector.load %arg3[%c2_70, %c0_71] : memref<3x128xf32, #tpu.memory_space<vmem>>, vector<1x128xf32>
    %109 = vector.broadcast %108 : vector<1x128xf32> to vector<128x128xf32>
    %110 = arith.addf %107, %109 : vector<128x128xf32>
    %111 = arith.addf %110, %0 : vector<128x128xf32>
    %c0_72 = arith.constant 0 : index
    %c0_73 = arith.constant 0 : index
    %112 = vector.load %arg4[%c0_72, %c0_73] : memref<128x128xf32, #tpu.memory_space<vmem>>, vector<128x128xf32>
    tpu.vector_store %arg4[%c0_72, %c0_73], %111 {strides = array<i32>} : memref<128x128xf32, #tpu.memory_space<vmem>>, vector<128x128xf32>,
    return
  }
  func.func @transform_0(%arg0: i32) -> (i32, i32) {
    %c0_i32 = arith.constant 0 : i32
    %c0_i32_0 = arith.constant 0 : i32
    return %arg0, %c0_i32 : i32, i32
  }
  func.func @transform_1(%arg0: i32) -> (i32, i32, i32, i32) {
    %c0_i32 = arith.constant 0 : i32
    %c0_i32_0 = arith.constant 0 : i32
    %c0_i32_1 = arith.constant 0 : i32
    %c0_i32_2 = arith.constant 0 : i32
    %c0_i32_3 = arith.constant 0 : i32
    return %c0_i32, %c0_i32_0, %c0_i32_1, %c0_i32_2 : i32, i32, i32, i32
  }
  func.func @transform_2(%arg0: i32) -> (i32, i32) {
    %c0_i32 = arith.constant 0 : i32
    %c0_i32_0 = arith.constant 0 : i32
    %c0_i32_1 = arith.constant 0 : i32
    return %c0_i32, %c0_i32_0 : i32, i32
  }
  func.func @transform_3(%arg0: i32) -> (i32, i32) {
    %c0_i32 = arith.constant 0 : i32
    %c0_i32_0 = arith.constant 0 : i32
    return %arg0, %c0_i32 : i32, i32
  }
}

</mosaic_0001>

<llo_original>
// kernel: basic_block.1
$region0: #{basic_block.1}
  #allocation0 [shape = 'u32[]', space=smem, size = 0x4, offset = 0x4, fixed_abs, tag = 'smem constant byte address 0x4 - core index']
  #allocation1 [shape = 'u32[72,128]{1,0:T(1,128)}', space=vmem, size = 0x9000, scoped, tag = 'internal scratch']
  %s0 = inlined_call_operand.vmem [shape: f32[512,128], index: 0, kind: input, shape index: {}]
  %s1 = inlined_call_operand.vmem [shape: bf16[3,3,128,128], index: 1, kind: input, shape index: {}]
  %s2 = inlined_call_operand.vmem [shape: f32[3,128], index: 2, kind: input, shape index: {}]
  %s3 = inlined_call_operand.vmem [shape: f32[512,128], index: 3, kind: output, shape index: {}]
  %s4 = sld [smem:[#allocation0]]
  $region45: #{basic_block.1} parent=0
    _
  %s6 = ssub.s32 1, %s4
  %s7 = scalar_select 0, %s6, %s4
  loop: start=0, step=1, limit=6
  $region2: #{basic_block.1} parent=0 // loop_pre_header
    _
  $region3: #{basic_block.1} parent=0 // loop_header
    %s9 = sphi 0, %s13
    %p10 = scmp.ge.s32.totalorder %s9, 6
    %s19 = sphi 0, %s21
    %s22 = sphi 0, %s19
    %s23 = sphi 0, %s22
    %s39 = sphi 0, %s23
    %s43 = sphi 0, %s43
    %s45 = sphi 0, %s43
    %s46 = sphi 0, %s45
    %s60 = sphi 0, %s46
    %s64 = sphi 0, %s64
    %s66 = sphi 0, %s64
    %s67 = sphi 0, %s66
    %s81 = sphi 0, %s67
    %s87 = sphi 0, %s89
    %s90 = sphi 0, %s87
    %s91 = sphi 0, %s90
    %s107 = sphi 0, %s91
  $region4: #{basic_block.1} parent=0 // loop_header_branch
    %12 = sbr.rel (%p10) target = $region8
  $region5: #{basic_block.1} parent=0 // loop_body
    %s14 = ssub.s32 %s9, 1
    %s15 = ssub.s32 %s9, 2
    %s16 = sadd.s32 %s9, 1
    %s17 = ssub.s32 %s9, %s16
    %p18 = scmp.eq.s32.totalorder %s17, 0
    %s20 = sadd.s32 %s19, 1
    %s21 = scalar_select %p18, %s19, %s20
    %p24 = pneg %p18
    %p25 = scmp.eq.s32.totalorder %s9, 3
    %p26 = por %p24, %p25
    %p27 = scmp.ne.s32.totalorder %s19, %s22
    %p28 = scmp.eq.s32.totalorder %s9, 0
    %p29 = por %p27, %p28
    %p30 = scmp.ne.s32.totalorder %s19, %s22
    %p31 = scmp.eq.s32.totalorder %s14, 3
    %p32 = por %p30, %p31
    %p33 = scmp.ne.s32.totalorder %s22, %s23
    %p34 = scmp.eq.s32.totalorder %s14, 0
    %p35 = por %p33, %p34
    %p36 = scmp.ne.s32.totalorder %s22, %s23
    %p37 = scmp.eq.s32.totalorder %s15, 3
    %p38 = por %p36, %p37
    %p40 = scmp.ne.s32.totalorder %s23, %s39
    %p41 = scmp.eq.s32.totalorder %s15, 0
    %p42 = por %p40, %p41
    %s44 = sadd.s32 %s43, 1
    %p47 = scmp.eq.s32.totalorder %s9, 3
    %p48 = scmp.ne.s32.totalorder %s43, %s45
    %p49 = scmp.eq.s32.totalorder %s9, 0
    %p50 = por %p48, %p49
    %p51 = scmp.ne.s32.totalorder %s43, %s45
    %p52 = scmp.eq.s32.totalorder %s14, 3
    %p53 = por %p51, %p52
    %p54 = scmp.ne.s32.totalorder %s45, %s46
    %p55 = scmp.eq.s32.totalorder %s14, 0
    %p56 = por %p54, %p55
    %p57 = scmp.ne.s32.totalorder %s45, %s46
    %p58 = scmp.eq.s32.totalorder %s15, 3
    %p59 = por %p57, %p58
    %p61 = scmp.ne.s32.totalorder %s46, %s60
    %p62 = scmp.eq.s32.totalorder %s15, 0
    %p63 = por %p61, %p62
    %s65 = sadd.s32 %s64, 1
    %p68 = scmp.eq.s32.totalorder %s9, 3
    %p69 = scmp.ne.s32.totalorder %s64, %s66
    %p70 = scmp.eq.s32.totalorder %s9, 0
    %p71 = por %p69, %p70
    %p72 = scmp.ne.s32.totalorder %s64, %s66
    %p73 = scmp.eq.s32.totalorder %s14, 3
    %p74 = por %p72, %p73
    %p75 = scmp.ne.s32.totalorder %s66, %s67
    %p76 = scmp.eq.s32.totalorder %s14, 0
    %p77 = por %p75, %p76
    %p78 = scmp.ne.s32.totalorder %s66, %s67
    %p79 = scmp.eq.s32.totalorder %s15, 3
    %p80 = por %p78, %p79
    %p82 = scmp.ne.s32.totalorder %s67, %s81
    %p83 = scmp.eq.s32.totalorder %s15, 0
    %p84 = por %p82, %p83
    %s85 = ssub.s32 %s9, %s16
    %p86 = scmp.eq.s32.totalorder %s85, 0
    %s88 = sadd.s32 %s87, 1
    %s89 = scalar_select %p86, %s87, %s88
    %p92 = pneg %p86
    %p93 = scmp.eq.s32.totalorder %s9, 3
    %p94 = por %p92, %p93
    %p95 = scmp.ne.s32.totalorder %s87, %s90
    %p96 = scmp.eq.s32.totalorder %s9, 0
    %p97 = por %p95, %p96
    %p98 = scmp.ne.s32.totalorder %s87, %s90
    %p99 = scmp.eq.s32.totalorder %s14, 3
    %p100 = por %p98, %p99
    %p101 = scmp.ne.s32.totalorder %s90, %s91
    %p102 = scmp.eq.s32.totalorder %s14, 0
    %p103 = por %p101, %p102
    %p104 = scmp.ne.s32.totalorder %s90, %s91
    %p105 = scmp.eq.s32.totalorder %s15, 3
    %p106 = por %p104, %p105
    %p108 = scmp.ne.s32.totalorder %s91, %s107
    %p109 = scmp.eq.s32.totalorder %s15, 0
    %p110 = por %p108, %p109
    %p111 = scmp.le.s32.totalorder 1, %s9
    %p112 = scmp.lt.s32.totalorder %s9, 5
    %p113 = pnand %p111, %p112
    %p114 = pneg %p113
    // Predicated region
    $region9: #{basic_block.1} parent=5 // pred_check
      _
    $region10: #{basic_block.1} parent=5 // pred_check_branch
      %116 = sbr.rel (%p113) target = $region12
    $region11: #{basic_block.1} parent=5 // pred_region
      %s117 = ssub.s32 %s9, 1
      // Predicated region
      $region13: #{basic_block.1} parent=11 // pred_check
        %p118 = pneg %p56
      $region14: #{basic_block.1} parent=11 // pred_check_branch
        %120 = sbr.rel (%p118) target = $region16
      $region15: #{basic_block.1} parent=11 // pred_region
        _
      $region16: #{basic_block.1} parent=11 // pred_fallthru
        _
      // Predicated region
      $region17: #{basic_block.1} parent=11 // pred_check
        %p121 = pneg %p77
      $region18: #{basic_block.1} parent=11 // pred_check_branch
        %123 = sbr.rel (%p121) target = $region20
      $region19: #{basic_block.1} parent=11 // pred_region
        _
      $region20: #{basic_block.1} parent=11 // pred_fallthru
        _
    $region12: #{basic_block.1} parent=5 // pred_fallthru
      _
    %p124 = scmp.lt.s32.totalorder %s9, 4
    // Predicated region
    $region21: #{basic_block.1} parent=5 // pred_check
      %p125 = pneg %p124
    $region22: #{basic_block.1} parent=5 // pred_check_branch
      %127 = sbr.rel (%p125) target = $region24
    $region23: #{basic_block.1} parent=5 // pred_region
      // Predicated region
      $region25: #{basic_block.1} parent=23 // pred_check
        %p128 = pneg %p29
      $region26: #{basic_block.1} parent=23 // pred_check_branch
        %130 = sbr.rel (%p128) target = $region28
      $region27: #{basic_block.1} parent=23 // pred_region
        %s131 = smul.u32 16, %s9
        %p132 = scmp.lt.s32.totalorder %s131, 63
        %s133 = scalar_select %p132, %s131, 63
        %s134 = smul.addr %s133, 8
        %s135 = scalar_lea.vmem %s0, %s134
        %s136 = smul.u32 16, %s9
      $region28: #{basic_block.1} parent=23 // pred_fallthru
        _
    $region24: #{basic_block.1} parent=5 // pred_fallthru
      _
    %p137 = scmp.le.s32.totalorder 1, %s9
    %p138 = scmp.lt.s32.totalorder %s9, 5
    %p139 = pnand %p137, %p138
    %p140 = pneg %p139
    // Predicated region
    $region29: #{basic_block.1} parent=5 // pred_check
      _
    $region30: #{basic_block.1} parent=5 // pred_check_branch
      %142 = sbr.rel (%p139) target = $region32
    $region31: #{basic_block.1} parent=5 // pred_region
      %s143 = ssub.s32 %s9, 1
      %s144 = smul.u32 16, %s14
      %p145 = scmp.lt.s32.totalorder %s144, 63
      %s146 = scalar_select %p145, %s144, 63
      %s147 = smul.addr %s146, 8
      %s148 = scalar_lea.vmem %s0, %s147
      %p149 = pneg %p35
      %p150 = pneg %p32
      %p151 = pneg %p56
      %p152 = pneg %p53
      %p153 = pneg %p77
      %p154 = pneg %p74
      %p155 = pneg %p103
      %p156 = pneg %p100
      %s157 = smul.u32 16, %s14
      %p158 = scmp.lt.s32.totalorder %s157, 63
      %s159 = scalar_select %p158, %s157, 63
      %s160 = smul.addr %s159, 8
      %s161 = scalar_lea.vmem %s3, %s160
      %s162 = smul.u32 16, %s14
      %p163 = scmp.lt.s32.totalorder %s162, 63
      %s164 = scalar_select %p163, %s162, 63
      %s165 = smul.addr %s164, 8
      %s166 = scalar_lea.vmem %s0, %s165
      %s167 = smul.u32 16, %s14
      %s168 = smul.u32 16, %s14
      %p169 = scmp.lt.s32.totalorder %s168, 63
      %s170 = scalar_select %p169, %s168, 63
      %s171 = smul.addr %s170, 8
      %s172 = scalar_lea.vmem %s3, %s171
      %s173 = smul.u32 16, %s14
      %v174 = vld [vmem:[%s166] sm:$0xff]
      %v175 = vld [vmem:[%s166 + $0x8] sm:$0xff]
      %v176 = vld [vmem:[%s166 + $0x10] sm:$0xff]
      %v177 = vld [vmem:[%s166 + $0x18] sm:$0xff]
      %v178 = vld [vmem:[%s166 + $0x20] sm:$0xff]
      %v179 = vld [vmem:[%s166 + $0x28] sm:$0xff]
      %v180 = vld [vmem:[%s166 + $0x30] sm:$0xff]
      %v181 = vld [vmem:[%s166 + $0x38] sm:$0xff]
      %v182 = vld [vmem:[%s166 + $0x40] sm:$0xff]
      %v183 = vld [vmem:[%s166 + $0x48] sm:$0xff]
      %v184 = vld [vmem:[%s166 + $0x50] sm:$0xff]
      %v185 = vld [vmem:[%s166 + $0x58] sm:$0xff]
      %v186 = vld [vmem:[%s166 + $0x60] sm:$0xff]
      %v187 = vld [vmem:[%s166 + $0x68] sm:$0xff]
      %v188 = vld [vmem:[%s166 + $0x70] sm:$0xff]
      %v189 = vld [vmem:[%s166 + $0x78] sm:$0xff]
      %v190 = vlaneseq
      %v191 = vshrl.u32 %v190, 7
      %v192 = vadd.s32 %v191, 8
      %v193 = vadd.s32 %v191, 16
      %v194 = vadd.s32 %v191, 24
      %v195 = vadd.s32 %v191, 32
      %v196 = vadd.s32 %v191, 40
      %v197 = vadd.s32 %v191, 48
      %v198 = vadd.s32 %v191, 56
      %v199 = vadd.s32 %v191, 64
      %v200 = vadd.s32 %v191, 72
      %v201 = vadd.s32 %v191, 80
      %v202 = vadd.s32 %v191, 88
      %v203 = vadd.s32 %v191, 96
      %v204 = vadd.s32 %v191, 104
      %v205 = vadd.s32 %v191, 112
      %v206 = vadd.s32 %v191, 120
      %vm207 = vcmp.lt.s32.totalorder %v191, 0
      %v208 = vsub.s32 0, %v191
      %v209 = vsel %vm207, %v208, %v191
      %v210 = vshrl.u32 %v209, 4
      %v211 = vand.u32 %v209, 15
      %v212 = vsub.s32 0, %v211
      %v213 = vsel %vm207, %v212, %v211
      %vm214 = vcmp.lt.s32.totalorder %v192, 0
      %v215 = vsub.s32 0, %v192
      %v216 = vsel %vm214, %v215, %v192
      %v217 = vshrl.u32 %v216, 4
      %v218 = vand.u32 %v216, 15
      %v219 = vsub.s32 0, %v218
      %v220 = vsel %vm214, %v219, %v218
      %vm221 = vcmp.lt.s32.totalorder %v193, 0
      %v222 = vsub.s32 0, %v193
      %v223 = vsel %vm221, %v222, %v193
      %v224 = vshrl.u32 %v223, 4
      %v225 = vand.u32 %v223, 15
      %v226 = vsub.s32 0, %v225
      %v227 = vsel %vm221, %v226, %v225
      %vm228 = vcmp.lt.s32.totalorder %v194, 0
      %v229 = vsub.s32 0, %v194
      %v230 = vsel %vm228, %v229, %v194
      %v231 = vshrl.u32 %v230, 4
      %v232 = vand.u32 %v230, 15
      %v233 = vsub.s32 0, %v232
      %v234 = vsel %vm228, %v233, %v232
      %vm235 = vcmp.lt.s32.totalorder %v195, 0
      %v236 = vsub.s32 0, %v195
      %v237 = vsel %vm235, %v236, %v195
      %v238 = vshrl.u32 %v237, 4
      %v239 = vand.u32 %v237, 15
      %v240 = vsub.s32 0, %v239
      %v241 = vsel %vm235, %v240, %v239
      %vm242 = vcmp.lt.s32.totalorder %v196, 0
      %v243 = vsub.s32 0, %v196
      %v244 = vsel %vm242, %v243, %v196
      %v245 = vshrl.u32 %v244, 4
      %v246 = vand.u32 %v244, 15
      %v247 = vsub.s32 0, %v246
      %v248 = vsel %vm242, %v247, %v246
      %vm249 = vcmp.lt.s32.totalorder %v197, 0
      %v250 = vsub.s32 0, %v197
      %v251 = vsel %vm249, %v250, %v197
      %v252 = vshrl.u32 %v251, 4
      %v253 = vand.u32 %v251, 15
      %v254 = vsub.s32 0, %v253
      %v255 = vsel %vm249, %v254, %v253
      %vm256 = vcmp.lt.s32.totalorder %v198, 0
      %v257 = vsub.s32 0, %v198
      %v258 = vsel %vm256, %v257, %v198
      %v259 = vshrl.u32 %v258, 4
      %v260 = vand.u32 %v258, 15
      %v261 = vsub.s32 0, %v260
      %v262 = vsel %vm256, %v261, %v260
      %vm263 = vcmp.lt.s32.totalorder %v199, 0
      %v264 = vsub.s32 0, %v199
      %v265 = vsel %vm263, %v264, %v199
      %v266 = vshrl.u32 %v265, 4
      %v267 = vand.u32 %v265, 15
      %v268 = vsub.s32 0, %v267
      %v269 = vsel %vm263, %v268, %v267
      %vm270 = vcmp.lt.s32.totalorder %v200, 0
      %v271 = vsub.s32 0, %v200
      %v272 = vsel %vm270, %v271, %v200
      %v273 = vshrl.u32 %v272, 4
      %v274 = vand.u32 %v272, 15
      %v275 = vsub.s32 0, %v274
      %v276 = vsel %vm270, %v275, %v274
      %vm277 = vcmp.lt.s32.totalorder %v201, 0
      %v278 = vsub.s32 0, %v201
      %v279 = vsel %vm277, %v278, %v201
      %v280 = vshrl.u32 %v279, 4
      %v281 = vand.u32 %v279, 15
      %v282 = vsub.s32 0, %v281
      %v283 = vsel %vm277, %v282, %v281
      %vm284 = vcmp.lt.s32.totalorder %v202, 0
      %v285 = vsub.s32 0, %v202
      %v286 = vsel %vm284, %v285, %v202
      %v287 = vshrl.u32 %v286, 4
      %v288 = vand.u32 %v286, 15
      %v289 = vsub.s32 0, %v288
      %v290 = vsel %vm284, %v289, %v288
      %vm291 = vcmp.lt.s32.totalorder %v203, 0
      %v292 = vsub.s32 0, %v203
      %v293 = vsel %vm291, %v292, %v203
      %v294 = vshrl.u32 %v293, 4
      %v295 = vand.u32 %v293, 15
      %v296 = vsub.s32 0, %v295
      %v297 = vsel %vm291, %v296, %v295
      %vm298 = vcmp.lt.s32.totalorder %v204, 0
      %v299 = vsub.s32 0, %v204
      %v300 = vsel %vm298, %v299, %v204
      %v301 = vshrl.u32 %v300, 4
      %v302 = vand.u32 %v300, 15
      %v303 = vsub.s32 0, %v302
      %v304 = vsel %vm298, %v303, %v302
      %vm305 = vcmp.lt.s32.totalorder %v205, 0
      %v306 = vsub.s32 0, %v205
      %v307 = vsel %vm305, %v306, %v205
      %v308 = vshrl.u32 %v307, 4
      %v309 = vand.u32 %v307, 15
      %v310 = vsub.s32 0, %v309
      %v311 = vsel %vm305, %v310, %v309
      %vm312 = vcmp.lt.s32.totalorder %v206, 0
      %v313 = vsub.s32 0, %v206
      %v314 = vsel %vm312, %v313, %v206
      %v315 = vshrl.u32 %v314, 4
      %v316 = vand.u32 %v314, 15
      %v317 = vsub.s32 0, %v316
      %v318 = vsel %vm312, %v317, %v316
      %vm319 = vcmp.ne.s32.totalorder %v213, 0
      %vm320 = vcmp.ne.s32.totalorder %v220, 0
      %vm321 = vcmp.ne.s32.totalorder %v227, 0
      %vm322 = vcmp.ne.s32.totalorder %v234, 0
      %vm323 = vcmp.ne.s32.totalorder %v241, 0
      %vm324 = vcmp.ne.s32.totalorder %v248, 0
      %vm325 = vcmp.ne.s32.totalorder %v255, 0
      %vm326 = vcmp.ne.s32.totalorder %v262, 0
      %vm327 = vcmp.ne.s32.totalorder %v269, 0
      %vm328 = vcmp.ne.s32.totalorder %v276, 0
      %vm329 = vcmp.ne.s32.totalorder %v283, 0
      %vm330 = vcmp.ne.s32.totalorder %v290, 0
      %vm331 = vcmp.ne.s32.totalorder %v297, 0
      %vm332 = vcmp.ne.s32.totalorder %v304, 0
      %vm333 = vcmp.ne.s32.totalorder %v311, 0
      %vm334 = vcmp.ne.s32.totalorder %v318, 0
      %vm335 = vcmp.lt.s32.totalorder %v213, 0
      %vm336 = vcmp.lt.s32.totalorder %v220, 0
      %vm337 = vcmp.lt.s32.totalorder %v227, 0
      %vm338 = vcmp.lt.s32.totalorder %v234, 0
      %vm339 = vcmp.lt.s32.totalorder %v241, 0
      %vm340 = vcmp.lt.s32.totalorder %v248, 0
      %vm341 = vcmp.lt.s32.totalorder %v255, 0
      %vm342 = vcmp.lt.s32.totalorder %v262, 0
      %vm343 = vcmp.lt.s32.totalorder %v269, 0
      %vm344 = vcmp.lt.s32.totalorder %v276, 0
      %vm345 = vcmp.lt.s32.totalorder %v283, 0
      %vm346 = vcmp.lt.s32.totalorder %v290, 0
      %vm347 = vcmp.lt.s32.totalorder %v297, 0
      %vm348 = vcmp.lt.s32.totalorder %v304, 0
      %vm349 = vcmp.lt.s32.totalorder %v311, 0
      %vm350 = vcmp.lt.s32.totalorder %v318, 0
      %vm351 = vmand %vm335, %vm319
      %vm352 = vmand %vm336, %vm320
      %vm353 = vmand %vm337, %vm321
      %vm354 = vmand %vm338, %vm322
      %vm355 = vmand %vm339, %vm323
      %vm356 = vmand %vm340, %vm324
      %vm357 = vmand %vm341, %vm325
      %vm358 = vmand %vm342, %vm326
      %vm359 = vmand %vm343, %vm327
      %vm360 = vmand %vm344, %vm328
      %vm361 = vmand %vm345, %vm329
      %vm362 = vmand %vm346, %vm330
      %vm363 = vmand %vm347, %vm331
      %vm364 = vmand %vm348, %vm332
      %vm365 = vmand %vm349, %vm333
      %vm366 = vmand %vm350, %vm334
      %v367 = vadd.s32 %v213, 16
      %v368 = vadd.s32 %v220, 16
      %v369 = vadd.s32 %v227, 16
      %v370 = vadd.s32 %v234, 16
      %v371 = vadd.s32 %v241, 16
      %v372 = vadd.s32 %v248, 16
      %v373 = vadd.s32 %v255, 16
      %v374 = vadd.s32 %v262, 16
      %v375 = vadd.s32 %v269, 16
      %v376 = vadd.s32 %v276, 16
      %v377 = vadd.s32 %v283, 16
      %v378 = vadd.s32 %v290, 16
      %v379 = vadd.s32 %v297, 16
      %v380 = vadd.s32 %v304, 16
      %v381 = vadd.s32 %v311, 16
      %v382 = vadd.s32 %v318, 16
      %v383 = vsel %vm351, %v367, %v213
      %v384 = vsel %vm352, %v368, %v220
      %v385 = vsel %vm353, %v369, %v227
      %v386 = vsel %vm354, %v370, %v234
      %v387 = vsel %vm355, %v371, %v241
      %v388 = vsel %vm356, %v372, %v248
      %v389 = vsel %vm357, %v373, %v255
      %v390 = vsel %vm358, %v374, %v262
      %v391 = vsel %vm359, %v375, %v269
      %v392 = vsel %vm360, %v376, %v276
      %v393 = vsel %vm361, %v377, %v283
      %v394 = vsel %vm362, %v378, %v290
      %v395 = vsel %vm363, %v379, %v297
      %v396 = vsel %vm364, %v380, %v304
      %v397 = vsel %vm365, %v381, %v311
      %v398 = vsel %vm366, %v382, %v318
      %vm399 = vcmp.eq.s32.totalorder %v383, 0
      %vm400 = vcmp.eq.s32.totalorder %v384, 0
      %vm401 = vcmp.eq.s32.totalorder %v385, 0
      %vm402 = vcmp.eq.s32.totalorder %v386, 0
      %vm403 = vcmp.eq.s32.totalorder %v387, 0
      %vm404 = vcmp.eq.s32.totalorder %v388, 0
      %vm405 = vcmp.eq.s32.totalorder %v389, 0
      %vm406 = vcmp.eq.s32.totalorder %v390, 0
      %vm407 = vcmp.eq.s32.totalorder %v391, 0
      %vm408 = vcmp.eq.s32.totalorder %v392, 0
      %vm409 = vcmp.eq.s32.totalorder %v393, 0
      %vm410 = vcmp.eq.s32.totalorder %v394, 0
      %vm411 = vcmp.eq.s32.totalorder %v395, 0
      %vm412 = vcmp.eq.s32.totalorder %v396, 0
      %vm413 = vcmp.eq.s32.totalorder %v397, 0
      %vm414 = vcmp.eq.s32.totalorder %v398, 0
      %vm415 = vcmp.eq.s32.totalorder %v383, 15
      %vm416 = vcmp.eq.s32.totalorder %v384, 15
      %vm417 = vcmp.eq.s32.totalorder %v385, 15
      %vm418 = vcmp.eq.s32.totalorder %v386, 15
      %vm419 = vcmp.eq.s32.totalorder %v387, 15
      %vm420 = vcmp.eq.s32.totalorder %v388, 15
      %vm421 = vcmp.eq.s32.totalorder %v389, 15
      %vm422 = vcmp.eq.s32.totalorder %v390, 15
      %vm423 = vcmp.eq.s32.totalorder %v391, 15
      %vm424 = vcmp.eq.s32.totalorder %v392, 15
      %vm425 = vcmp.eq.s32.totalorder %v393, 15
      %vm426 = vcmp.eq.s32.totalorder %v394, 15
      %vm427 = vcmp.eq.s32.totalorder %v395, 15
      %vm428 = vcmp.eq.s32.totalorder %v396, 15
      %vm429 = vcmp.eq.s32.totalorder %v397, 15
      %vm430 = vcmp.eq.s32.totalorder %v398, 15
      %v431 = vrot.slane %v174, 7
      %v432 = vrot.slane %v175, 7
      %v433 = vrot.slane %v176, 7
      %v434 = vrot.slane %v177, 7
      %v435 = vrot.slane %v178, 7
      %v436 = vrot.slane %v179, 7
      %v437 = vrot.slane %v180, 7
      %v438 = vrot.slane %v181, 7
      %v439 = vrot.slane %v182, 7
      %v440 = vrot.slane %v183, 7
      %v441 = vrot.slane %v184, 7
      %v442 = vrot.slane %v185, 7
      %v443 = vrot.slane %v186, 7
      %v444 = vrot.slane %v187, 7
      %v445 = vrot.slane %v188, 7
      %v446 = vrot.slane %v189, 7
      %vm447 = vcmp.lt.s32.totalorder %v191, 1
      %v448 = vsel %vm447, %v445, %v446
      %v449 = vsel %vm447, %v444, %v445
      %v450 = vsel %vm447, %v443, %v444
      %v451 = vsel %vm447, %v442, %v443
      %v452 = vsel %vm447, %v441, %v442
      %v453 = vsel %vm447, %v440, %v441
      %v454 = vsel %vm447, %v439, %v440
      %v455 = vsel %vm447, %v438, %v439
      %v456 = vsel %vm447, %v437, %v438
      %v457 = vsel %vm447, %v436, %v437
      %v458 = vsel %vm447, %v435, %v436
      %v459 = vsel %vm447, %v434, %v435
      %v460 = vsel %vm447, %v433, %v434
      %v461 = vsel %vm447, %v432, %v433
      %v462 = vsel %vm447, %v431, %v432
      %v463 = vsel %vm447, %v446, %v431
      %v464 = vsel %vm399, 0.0, %v463
      %v465 = vsel %vm400, 0.0, %v462
      %v466 = vsel %vm401, 0.0, %v461
      %v467 = vsel %vm402, 0.0, %v460
      %v468 = vsel %vm403, 0.0, %v459
      %v469 = vsel %vm404, 0.0, %v458
      %v470 = vsel %vm405, 0.0, %v457
      %v471 = vsel %vm406, 0.0, %v456
      %v472 = vsel %vm407, 0.0, %v455
      %v473 = vsel %vm408, 0.0, %v454
      %v474 = vsel %vm409, 0.0, %v453
      %v475 = vsel %vm410, 0.0, %v452
      %v476 = vsel %vm411, 0.0, %v451
      %v477 = vsel %vm412, 0.0, %v450
      %v478 = vsel %vm413, 0.0, %v449
      %v479 = vsel %vm414, 0.0, %v448
      %v480 = vrot.slane %v174, 1
      %v481 = vrot.slane %v175, 1
      %v482 = vrot.slane %v176, 1
      %v483 = vrot.slane %v177, 1
      %v484 = vrot.slane %v178, 1
      %v485 = vrot.slane %v179, 1
      %v486 = vrot.slane %v180, 1
      %v487 = vrot.slane %v181, 1
      %v488 = vrot.slane %v182, 1
      %v489 = vrot.slane %v183, 1
      %v490 = vrot.slane %v184, 1
      %v491 = vrot.slane %v185, 1
      %v492 = vrot.slane %v186, 1
      %v493 = vrot.slane %v187, 1
      %v494 = vrot.slane %v188, 1
      %v495 = vrot.slane %v189, 1
      %vm496 = vcmp.lt.s32.totalorder %v191, 7
      %v497 = vsel %vm496, %v494, %v495
      %v498 = vsel %vm496, %v493, %v494
      %v499 = vsel %vm496, %v492, %v493
      %v500 = vsel %vm496, %v491, %v492
      %v501 = vsel %vm496, %v490, %v491
      %v502 = vsel %vm496, %v489, %v490
      %v503 = vsel %vm496, %v488, %v489
      %v504 = vsel %vm496, %v487, %v488
      %v505 = vsel %vm496, %v486, %v487
      %v506 = vsel %vm496, %v485, %v486
      %v507 = vsel %vm496, %v484, %v485
      %v508 = vsel %vm496, %v483, %v484
      %v509 = vsel %vm496, %v482, %v483
      %v510 = vsel %vm496, %v481, %v482
      %v511 = vsel %vm496, %v480, %v481
      %v512 = vsel %vm496, %v495, %v480
      %v513 = vsel %vm415, 0.0, %v511
      %v514 = vsel %vm416, 0.0, %v510
      %v515 = vsel %vm417, 0.0, %v509
      %v516 = vsel %vm418, 0.0, %v508
      %v517 = vsel %vm419, 0.0, %v507
      %v518 = vsel %vm420, 0.0, %v506
      %v519 = vsel %vm421, 0.0, %v505
      %v520 = vsel %vm422, 0.0, %v504
      %v521 = vsel %vm423, 0.0, %v503
      %v522 = vsel %vm424, 0.0, %v502
      %v523 = vsel %vm425, 0.0, %v501
      %v524 = vsel %vm426, 0.0, %v500
      %v525 = vsel %vm427, 0.0, %v499
      %v526 = vsel %vm428, 0.0, %v498
      %v527 = vsel %vm429, 0.0, %v497
      %v528 = vsel %vm430, 0.0, %v512
      %v529 = vpack.c.bf16 %v465, %v464
      %v530 = vpack.c.bf16 %v467, %v466
      %v531 = vpack.c.bf16 %v469, %v468
      %v532 = vpack.c.bf16 %v471, %v470
      %v533 = vpack.c.bf16 %v473, %v472
      %v534 = vpack.c.bf16 %v475, %v474
      %v535 = vpack.c.bf16 %v477, %v476
      %v536 = vpack.c.bf16 %v479, %v478
      %v537 = vld [vmem:[%s1] sm:$0xf]
      %v538 = vld [vmem:[%s1 + $0x4] sm:$0xf]
      %v539 = vld [vmem:[%s1 + $0x8] sm:$0xf]
      %v540 = vld [vmem:[%s1 + $0xc] sm:$0xf]
      %v541 = vld [vmem:[%s1 + $0x10] sm:$0xf]
      %v542 = vld [vmem:[%s1 + $0x14] sm:$0xf]
      %v543 = vld [vmem:[%s1 + $0x18] sm:$0xf]
      %v544 = vld [vmem:[%s1 + $0x1c] sm:$0xf]
      %v545 = vld [vmem:[%s1 + $0x20] sm:$0xf]
      %v546 = vld [vmem:[%s1 + $0x24] sm:$0xf]
      %v547 = vld [vmem:[%s1 + $0x28] sm:$0xf]
      %v548 = vld [vmem:[%s1 + $0x2c] sm:$0xf]
      %v549 = vld [vmem:[%s1 + $0x30] sm:$0xf]
      %v550 = vld [vmem:[%s1 + $0x34] sm:$0xf]
      %v551 = vld [vmem:[%s1 + $0x38] sm:$0xf]
      %v552 = vld [vmem:[%s1 + $0x3c] sm:$0xf]
      %v553 = vpack.c.bf16 %v175, %v174
      %v554 = vpack.c.bf16 %v177, %v176
      %v555 = vpack.c.bf16 %v179, %v178
      %v556 = vpack.c.bf16 %v181, %v180
      %v557 = vpack.c.bf16 %v183, %v182
      %v558 = vpack.c.bf16 %v185, %v184
      %v559 = vpack.c.bf16 %v187, %v186
      %v560 = vpack.c.bf16 %v189, %v188
      %s561 = scalar_lea.vmem %s1, 64
      %v562 = vld [vmem:[%s561] sm:$0xf]
      %v563 = vld [vmem:[%s561 + $0x4] sm:$0xf]
      %v564 = vld [vmem:[%s561 + $0x8] sm:$0xf]
      %v565 = vld [vmem:[%s561 + $0xc] sm:$0xf]
      %v566 = vld [vmem:[%s561 + $0x10] sm:$0xf]
      %v567 = vld [vmem:[%s561 + $0x14] sm:$0xf]
      %v568 = vld [vmem:[%s561 + $0x18] sm:$0xf]
      %v569 = vld [vmem:[%s561 + $0x1c] sm:$0xf]
      %v570 = vld [vmem:[%s561 + $0x20] sm:$0xf]
      %v571 = vld [vmem:[%s561 + $0x24] sm:$0xf]
      %v572 = vld [vmem:[%s561 + $0x28] sm:$0xf]
      %v573 = vld [vmem:[%s561 + $0x2c] sm:$0xf]
      %v574 = vld [vmem:[%s561 + $0x30] sm:$0xf]
      %v575 = vld [vmem:[%s561 + $0x34] sm:$0xf]
      %v576 = vld [vmem:[%s561 + $0x38] sm:$0xf]
      %v577 = vld [vmem:[%s561 + $0x3c] sm:$0xf]
      %v594 = vunpack.c.l.b16 %v562
      %v595 = vunpack.c.l.b16 %v563
      %v596 = vunpack.c.l.b16 %v564
      %v597 = vunpack.c.l.b16 %v565
      %v598 = vunpack.c.l.b16 %v566
      %v599 = vunpack.c.l.b16 %v567
      %v600 = vunpack.c.l.b16 %v568
      %v601 = vunpack.c.l.b16 %v569
      %v602 = vunpack.c.l.b16 %v570
      %v603 = vunpack.c.l.b16 %v571
      %v604 = vunpack.c.l.b16 %v572
      %v605 = vunpack.c.l.b16 %v573
      %v606 = vunpack.c.l.b16 %v574
      %v607 = vunpack.c.l.b16 %v575
      %v608 = vunpack.c.l.b16 %v576
      %v609 = vunpack.c.l.b16 %v577
      %v610 = vpack.c.b16 %v595, %v594
      %v611 = vpack.c.b16 %v597, %v596
      %v612 = vpack.c.b16 %v599, %v598
      %v613 = vpack.c.b16 %v601, %v600
      %v614 = vpack.c.b16 %v603, %v602
      %v615 = vpack.c.b16 %v605, %v604
      %v616 = vpack.c.b16 %v607, %v606
      %v617 = vpack.c.b16 %v609, %v608
      %626 = vmatpush.bf16.msra.mxu0 %v617
      %627 = vmatpush.bf16.msra.mxu0 %v616
      %628 = vmatpush.bf16.msra.mxu0 %v615
      %629 = vmatpush.bf16.msra.mxu0 %v614
      %630 = vmatpush.bf16.msra.mxu0 %v613
      %631 = vmatpush.bf16.msra.mxu0 %v612
      %632 = vmatpush.bf16.msra.mxu0 %v611
      %633 = vmatpush.bf16.msra.mxu0 %v610
      %634 = vmatmul.bf16.gmra.mxu0 %v553
      %v635 = vpop.f32.mrf.mxu0
      %v636 = vadd.f32 0.0, %v635
      %v637 = vpop.f32.mrf.mxu0
      %v638 = vadd.f32 0.0, %v637
      %639 = vmatmul.bf16.gmra.mxu0 %v554
      %v640 = vpop.f32.mrf.mxu0
      %v641 = vadd.f32 0.0, %v640
      %v642 = vpop.f32.mrf.mxu0
      %v643 = vadd.f32 0.0, %v642
      %644 = vmatmul.bf16.gmra.mxu0 %v555
      %v645 = vpop.f32.mrf.mxu0
      %v646 = vadd.f32 0.0, %v645
      %v647 = vpop.f32.mrf.mxu0
      %v648 = vadd.f32 0.0, %v647
      %649 = vmatmul.bf16.gmra.mxu0 %v556
      %v650 = vpop.f32.mrf.mxu0
      %v651 = vadd.f32 0.0, %v650
      %v652 = vpop.f32.mrf.mxu0
      %v653 = vadd.f32 0.0, %v652
      %654 = vmatmul.bf16.gmra.mxu0 %v557
      %v655 = vpop.f32.mrf.mxu0
      %v656 = vadd.f32 0.0, %v655
      %v657 = vpop.f32.mrf.mxu0
      %v658 = vadd.f32 0.0, %v657
      %659 = vmatmul.bf16.gmra.mxu0 %v558
      %v660 = vpop.f32.mrf.mxu0
      %v661 = vadd.f32 0.0, %v660
      %v662 = vpop.f32.mrf.mxu0
      %v663 = vadd.f32 0.0, %v662
      %664 = vmatmul.bf16.gmra.mxu0 %v559
      %v665 = vpop.f32.mrf.mxu0
      %v666 = vadd.f32 0.0, %v665
      %v667 = vpop.f32.mrf.mxu0
      %v668 = vadd.f32 0.0, %v667
      %669 = vmatmul.bf16.gmra.mxu0 %v560
      %v670 = vpop.f32.mrf.mxu0
      %v671 = vadd.f32 0.0, %v670
      %v672 = vpop.f32.mrf.mxu0
      %v673 = vadd.f32 0.0, %v672
      %674 = vdwg.mxu0
      %v691 = vunpack.c.l.b16 %v537
      %v692 = vunpack.c.l.b16 %v538
      %v693 = vunpack.c.l.b16 %v539
      %v694 = vunpack.c.l.b16 %v540
      %v695 = vunpack.c.l.b16 %v541
      %v696 = vunpack.c.l.b16 %v542
      %v697 = vunpack.c.l.b16 %v543
      %v698 = vunpack.c.l.b16 %v544
      %v699 = vunpack.c.l.b16 %v545
      %v700 = vunpack.c.l.b16 %v546
      %v701 = vunpack.c.l.b16 %v547
      %v702 = vunpack.c.l.b16 %v548
      %v703 = vunpack.c.l.b16 %v549
      %v704 = vunpack.c.l.b16 %v550
      %v705 = vunpack.c.l.b16 %v551
      %v706 = vunpack.c.l.b16 %v552
      %v707 = vpack.c.b16 %v692, %v691
      %v708 = vpack.c.b16 %v694, %v693
      %v709 = vpack.c.b16 %v696, %v695
      %v710 = vpack.c.b16 %v698, %v697
      %v711 = vpack.c.b16 %v700, %v699
      %v712 = vpack.c.b16 %v702, %v701
      %v713 = vpack.c.b16 %v704, %v703
      %v714 = vpack.c.b16 %v706, %v705
      %723 = vmatpush.bf16.msra.mxu0 %v714
      %724 = vmatpush.bf16.msra.mxu0 %v713
      %725 = vmatpush.bf16.msra.mxu0 %v712
      %726 = vmatpush.bf16.msra.mxu0 %v711
      %727 = vmatpush.bf16.msra.mxu0 %v710
      %728 = vmatpush.bf16.msra.mxu0 %v709
      %729 = vmatpush.bf16.msra.mxu0 %v708
      %730 = vmatpush.bf16.msra.mxu0 %v707
      %731 = vmatmul.bf16.gmra.mxu0 %v529
      %v732 = vpop.f32.mrf.mxu0
      %v733 = vadd.f32 %v636, %v732
      %v734 = vpop.f32.mrf.mxu0
      %v735 = vadd.f32 %v638, %v734
      %736 = vmatmul.bf16.gmra.mxu0 %v530
      %v737 = vpop.f32.mrf.mxu0
      %v738 = vadd.f32 %v641, %v737
      %v739 = vpop.f32.mrf.mxu0
      %v740 = vadd.f32 %v643, %v739
      %741 = vmatmul.bf16.gmra.mxu0 %v531
      %v742 = vpop.f32.mrf.mxu0
      %v743 = vadd.f32 %v646, %v742
      %v744 = vpop.f32.mrf.mxu0
      %v745 = vadd.f32 %v648, %v744
      %746 = vmatmul.bf16.gmra.mxu0 %v532
      %v747 = vpop.f32.mrf.mxu0
      %v748 = vadd.f32 %v651, %v747
      %v749 = vpop.f32.mrf.mxu0
      %v750 = vadd.f32 %v653, %v749
      %751 = vmatmul.bf16.gmra.mxu0 %v533
      %v752 = vpop.f32.mrf.mxu0
      %v753 = vadd.f32 %v656, %v752
      %v754 = vpop.f32.mrf.mxu0
      %v755 = vadd.f32 %v658, %v754
      %756 = vmatmul.bf16.gmra.mxu0 %v534
      %v757 = vpop.f32.mrf.mxu0
      %v758 = vadd.f32 %v661, %v757
      %v759 = vpop.f32.mrf.mxu0
      %v760 = vadd.f32 %v663, %v759
      %761 = vmatmul.bf16.gmra.mxu0 %v535
      %v762 = vpop.f32.mrf.mxu0
      %v763 = vadd.f32 %v666, %v762
      %v764 = vpop.f32.mrf.mxu0
      %v765 = vadd.f32 %v668, %v764
      %766 = vmatmul.bf16.gmra.mxu0 %v536
      %v767 = vpop.f32.mrf.mxu0
      %v768 = vadd.f32 %v671, %v767
      %v769 = vpop.f32.mrf.mxu0
      %v770 = vadd.f32 %v673, %v769
      %771 = vdwg.mxu0
      %v772 = vpack.c.bf16 %v514, %v513
      %v773 = vpack.c.bf16 %v516, %v515
      %v774 = vpack.c.bf16 %v518, %v517
      %v775 = vpack.c.bf16 %v520, %v519
      %v776 = vpack.c.bf16 %v522, %v521
      %v777 = vpack.c.bf16 %v524, %v523
      %v778 = vpack.c.bf16 %v526, %v525
      %v779 = vpack.c.bf16 %v528, %v527
      %s780 = scalar_lea.vmem %s1, 128
      %v781 = vld [vmem:[%s780] sm:$0xf]
      %v782 = vld [vmem:[%s780 + $0x4] sm:$0xf]
      %v783 = vld [vmem:[%s780 + $0x8] sm:$0xf]
      %v784 = vld [vmem:[%s780 + $0xc] sm:$0xf]
      %v785 = vld [vmem:[%s780 + $0x10] sm:$0xf]
      %v786 = vld [vmem:[%s780 + $0x14] sm:$0xf]
      %v787 = vld [vmem:[%s780 + $0x18] sm:$0xf]
      %v788 = vld [vmem:[%s780 + $0x1c] sm:$0xf]
      %v789 = vld [vmem:[%s780 + $0x20] sm:$0xf]
      %v790 = vld [vmem:[%s780 + $0x24] sm:$0xf]
      %v791 = vld [vmem:[%s780 + $0x28] sm:$0xf]
      %v792 = vld [vmem:[%s780 + $0x2c] sm:$0xf]
      %v793 = vld [vmem:[%s780 + $0x30] sm:$0xf]
      %v794 = vld [vmem:[%s780 + $0x34] sm:$0xf]
      %v795 = vld [vmem:[%s780 + $0x38] sm:$0xf]
      %v796 = vld [vmem:[%s780 + $0x3c] sm:$0xf]
      %v813 = vunpack.c.l.b16 %v781
      %v814 = vunpack.c.l.b16 %v782
      %v815 = vunpack.c.l.b16 %v783
      %v816 = vunpack.c.l.b16 %v784
      %v817 = vunpack.c.l.b16 %v785
      %v818 = vunpack.c.l.b16 %v786
      %v819 = vunpack.c.l.b16 %v787
      %v820 = vunpack.c.l.b16 %v788
      %v821 = vunpack.c.l.b16 %v789
      %v822 = vunpack.c.l.b16 %v790
      %v823 = vunpack.c.l.b16 %v791
      %v824 = vunpack.c.l.b16 %v792
      %v825 = vunpack.c.l.b16 %v793
      %v826 = vunpack.c.l.b16 %v794
      %v827 = vunpack.c.l.b16 %v795
      %v828 = vunpack.c.l.b16 %v796
      %v829 = vpack.c.b16 %v814, %v813
      %v830 = vpack.c.b16 %v816, %v815
      %v831 = vpack.c.b16 %v818, %v817
      %v832 = vpack.c.b16 %v820, %v819
      %v833 = vpack.c.b16 %v822, %v821
      %v834 = vpack.c.b16 %v824, %v823
      %v835 = vpack.c.b16 %v826, %v825
      %v836 = vpack.c.b16 %v828, %v827
      %845 = vmatpush.bf16.msra.mxu0 %v836
      %846 = vmatpush.bf16.msra.mxu0 %v835
      %847 = vmatpush.bf16.msra.mxu0 %v834
      %848 = vmatpush.bf16.msra.mxu0 %v833
      %849 = vmatpush.bf16.msra.mxu0 %v832
      %850 = vmatpush.bf16.msra.mxu0 %v831
      %851 = vmatpush.bf16.msra.mxu0 %v830
      %852 = vmatpush.bf16.msra.mxu0 %v829
      %853 = vmatmul.bf16.gmra.mxu0 %v772
      %v854 = vpop.f32.mrf.mxu0
      %v855 = vadd.f32 0.0, %v854
      %v856 = vpop.f32.mrf.mxu0
      %v857 = vadd.f32 0.0, %v856
      %858 = vmatmul.bf16.gmra.mxu0 %v773
      %v859 = vpop.f32.mrf.mxu0
      %v860 = vadd.f32 0.0, %v859
      %v861 = vpop.f32.mrf.mxu0
      %v862 = vadd.f32 0.0, %v861
      %863 = vmatmul.bf16.gmra.mxu0 %v774
      %v864 = vpop.f32.mrf.mxu0
      %v865 = vadd.f32 0.0, %v864
      %v866 = vpop.f32.mrf.mxu0
      %v867 = vadd.f32 0.0, %v866
      %868 = vmatmul.bf16.gmra.mxu0 %v775
      %v869 = vpop.f32.mrf.mxu0
      %v870 = vadd.f32 0.0, %v869
      %v871 = vpop.f32.mrf.mxu0
      %v872 = vadd.f32 0.0, %v871
      %873 = vmatmul.bf16.gmra.mxu0 %v776
      %v874 = vpop.f32.mrf.mxu0
      %v875 = vadd.f32 0.0, %v874
      %v876 = vpop.f32.mrf.mxu0
      %v877 = vadd.f32 0.0, %v876
      %878 = vmatmul.bf16.gmra.mxu0 %v777
      %v879 = vpop.f32.mrf.mxu0
      %v880 = vadd.f32 0.0, %v879
      %v881 = vpop.f32.mrf.mxu0
      %v882 = vadd.f32 0.0, %v881
      %883 = vmatmul.bf16.gmra.mxu0 %v778
      %v884 = vpop.f32.mrf.mxu0
      %v885 = vadd.f32 0.0, %v884
      %v886 = vpop.f32.mrf.mxu0
      %v887 = vadd.f32 0.0, %v886
      %888 = vmatmul.bf16.gmra.mxu0 %v779
      %v889 = vpop.f32.mrf.mxu0
      %v890 = vadd.f32 0.0, %v889
      %v891 = vpop.f32.mrf.mxu0
      %v892 = vadd.f32 0.0, %v891
      %893 = vdwg.mxu0
      %v894 = vadd.f32 %v733, %v855
      %v895 = vadd.f32 %v735, %v857
      %v896 = vadd.f32 %v738, %v860
      %v897 = vadd.f32 %v740, %v862
      %v898 = vadd.f32 %v743, %v865
      %v899 = vadd.f32 %v745, %v867
      %v900 = vadd.f32 %v748, %v870
      %v901 = vadd.f32 %v750, %v872
      %v902 = vadd.f32 %v753, %v875
      %v903 = vadd.f32 %v755, %v877
      %v904 = vadd.f32 %v758, %v880
      %v905 = vadd.f32 %v760, %v882
      %v906 = vadd.f32 %v763, %v885
      %v907 = vadd.f32 %v765, %v887
      %v908 = vadd.f32 %v768, %v890
      %v909 = vadd.f32 %v770, %v892
      %v910 = vld [vmem:[%s2] sm:$0x1]
      %v911 = vperm.slane %v910, 0
      %v912 = vadd.f32 %v894, %v911
      %v913 = vadd.f32 %v895, %v911
      %v914 = vadd.f32 %v896, %v911
      %v915 = vadd.f32 %v897, %v911
      %v916 = vadd.f32 %v898, %v911
      %v917 = vadd.f32 %v899, %v911
      %v918 = vadd.f32 %v900, %v911
      %v919 = vadd.f32 %v901, %v911
      %v920 = vadd.f32 %v902, %v911
      %v921 = vadd.f32 %v903, %v911
      %v922 = vadd.f32 %v904, %v911
      %v923 = vadd.f32 %v905, %v911
      %v924 = vadd.f32 %v906, %v911
      %v925 = vadd.f32 %v907, %v911
      %v926 = vadd.f32 %v908, %v911
      %v927 = vadd.f32 %v909, %v911
      %v928 = vmax.f32 %v912, 0.0
      %v929 = vmax.f32 %v913, 0.0
      %v930 = vmax.f32 %v914, 0.0
      %v931 = vmax.f32 %v915, 0.0
      %v932 = vmax.f32 %v916, 0.0
      %v933 = vmax.f32 %v917, 0.0
      %v934 = vmax.f32 %v918, 0.0
      %v935 = vmax.f32 %v919, 0.0
      %v936 = vmax.f32 %v920, 0.0
      %v937 = vmax.f32 %v921, 0.0
      %v938 = vmax.f32 %v922, 0.0
      %v939 = vmax.f32 %v923, 0.0
      %v940 = vmax.f32 %v924, 0.0
      %v941 = vmax.f32 %v925, 0.0
      %v942 = vmax.f32 %v926, 0.0
      %v943 = vmax.f32 %v927, 0.0
      %v944 = vrot.slane %v928, 7
      %v945 = vrot.slane %v929, 7
      %v946 = vrot.slane %v930, 7
      %v947 = vrot.slane %v931, 7
      %v948 = vrot.slane %v932, 7
      %v949 = vrot.slane %v933, 7
      %v950 = vrot.slane %v934, 7
      %v951 = vrot.slane %v935, 7
      %v952 = vrot.slane %v936, 7
      %v953 = vrot.slane %v937, 7
      %v954 = vrot.slane %v938, 7
      %v955 = vrot.slane %v939, 7
      %v956 = vrot.slane %v940, 7
      %v957 = vrot.slane %v941, 7
      %v958 = vrot.slane %v942, 7
      %v959 = vrot.slane %v943, 7
      %v960 = vsel %vm447, %v958, %v959
      %v961 = vsel %vm447, %v957, %v958
      %v962 = vsel %vm447, %v956, %v957
      %v963 = vsel %vm447, %v955, %v956
      %v964 = vsel %vm447, %v954, %v955
      %v965 = vsel %vm447, %v953, %v954
      %v966 = vsel %vm447, %v952, %v953
      %v967 = vsel %vm447, %v951, %v952
      %v968 = vsel %vm447, %v950, %v951
      %v969 = vsel %vm447, %v949, %v950
      %v970 = vsel %vm447, %v948, %v949
      %v971 = vsel %vm447, %v947, %v948
      %v972 = vsel %vm447, %v946, %v947
      %v973 = vsel %vm447, %v945, %v946
      %v974 = vsel %vm447, %v944, %v945
      %v975 = vsel %vm447, %v959, %v944
      %v976 = vsel %vm399, 0.0, %v975
      %v977 = vsel %vm400, 0.0, %v974
      %v978 = vsel %vm401, 0.0, %v973
      %v979 = vsel %vm402, 0.0, %v972
      %v980 = vsel %vm403, 0.0, %v971
      %v981 = vsel %vm404, 0.0, %v970
      %v982 = vsel %vm405, 0.0, %v969
      %v983 = vsel %vm406, 0.0, %v968
      %v984 = vsel %vm407, 0.0, %v967
      %v985 = vsel %vm408, 0.0, %v966
      %v986 = vsel %vm409, 0.0, %v965
      %v987 = vsel %vm410, 0.0, %v964
      %v988 = vsel %vm411, 0.0, %v963
      %v989 = vsel %vm412, 0.0, %v962
      %v990 = vsel %vm413, 0.0, %v961
      %v991 = vsel %vm414, 0.0, %v960
      %v992 = vrot.slane %v928, 1
      %v993 = vrot.slane %v929, 1
      %v994 = vrot.slane %v930, 1
      %v995 = vrot.slane %v931, 1
      %v996 = vrot.slane %v932, 1
      %v997 = vrot.slane %v933, 1
      %v998 = vrot.slane %v934, 1
      %v999 = vrot.slane %v935, 1
      %v1000 = vrot.slane %v936, 1
      %v1001 = vrot.slane %v937, 1
      %v1002 = vrot.slane %v938, 1
      %v1003 = vrot.slane %v939, 1
      %v1004 = vrot.slane %v940, 1
      %v1005 = vrot.slane %v941, 1
      %v1006 = vrot.slane %v942, 1
      %v1007 = vrot.slane %v943, 1
      %v1008 = vsel %vm496, %v1006, %v1007
      %v1009 = vsel %vm496, %v1005, %v1006
      %v1010 = vsel %vm496, %v1004, %v1005
      %v1011 = vsel %vm496, %v1003, %v1004
      %v1012 = vsel %vm496, %v1002, %v1003
      %v1013 = vsel %vm496, %v1001, %v1002
      %v1014 = vsel %vm496, %v1000, %v1001
      %v1015 = vsel %vm496, %v999, %v1000
      %v1016 = vsel %vm496, %v998, %v999
      %v1017 = vsel %vm496, %v997, %v998
      %v1018 = vsel %vm496, %v996, %v997
      %v1019 = vsel %vm496, %v995, %v996
      %v1020 = vsel %vm496, %v994, %v995
      %v1021 = vsel %vm496, %v993, %v994
      %v1022 = vsel %vm496, %v992, %v993
      %v1023 = vsel %vm496, %v1007, %v992
      %v1024 = vsel %vm415, 0.0, %v1022
      %v1025 = vsel %vm416, 0.0, %v1021
      %v1026 = vsel %vm417, 0.0, %v1020
      %v1027 = vsel %vm418, 0.0, %v1019
      %v1028 = vsel %vm419, 0.0, %v1018
      %v1029 = vsel %vm420, 0.0, %v1017
      %v1030 = vsel %vm421, 0.0, %v1016
      %v1031 = vsel %vm422, 0.0, %v1015
      %v1032 = vsel %vm423, 0.0, %v1014
      %v1033 = vsel %vm424, 0.0, %v1013
      %v1034 = vsel %vm425, 0.0, %v1012
      %v1035 = vsel %vm426, 0.0, %v1011
      %v1036 = vsel %vm427, 0.0, %v1010
      %v1037 = vsel %vm428, 0.0, %v1009
      %v1038 = vsel %vm429, 0.0, %v1008
      %v1039 = vsel %vm430, 0.0, %v1023
      %v1040 = vpack.c.bf16 %v977, %v976
      %v1041 = vpack.c.bf16 %v979, %v978
      %v1042 = vpack.c.bf16 %v981, %v980
      %v1043 = vpack.c.bf16 %v983, %v982
      %v1044 = vpack.c.bf16 %v985, %v984
      %v1045 = vpack.c.bf16 %v987, %v986
      %v1046 = vpack.c.bf16 %v989, %v988
      %v1047 = vpack.c.bf16 %v991, %v990
      %s1048 = scalar_lea.vmem %s1, 192
      %v1049 = vld [vmem:[%s1048] sm:$0xf]
      %v1050 = vld [vmem:[%s1048 + $0x4] sm:$0xf]
      %v1051 = vld [vmem:[%s1048 + $0x8] sm:$0xf]
      %v1052 = vld [vmem:[%s1048 + $0xc] sm:$0xf]
      %v1053 = vld [vmem:[%s1048 + $0x10] sm:$0xf]
      %v1054 = vld [vmem:[%s1048 + $0x14] sm:$0xf]
      %v1055 = vld [vmem:[%s1048 + $0x18] sm:$0xf]
      %v1056 = vld [vmem:[%s1048 + $0x1c] sm:$0xf]
      %v1057 = vld [vmem:[%s1048 + $0x20] sm:$0xf]
      %v1058 = vld [vmem:[%s1048 + $0x24] sm:$0xf]
      %v1059 = vld [vmem:[%s1048 + $0x28] sm:$0xf]
      %v1060 = vld [vmem:[%s1048 + $0x2c] sm:$0xf]
      %v1061 = vld [vmem:[%s1048 + $0x30] sm:$0xf]
      %v1062 = vld [vmem:[%s1048 + $0x34] sm:$0xf]
      %v1063 = vld [vmem:[%s1048 + $0x38] sm:$0xf]
      %v1064 = vld [vmem:[%s1048 + $0x3c] sm:$0xf]
      %v1065 = vpack.c.bf16 %v929, %v928
      %v1066 = vpack.c.bf16 %v931, %v930
      %v1067 = vpack.c.bf16 %v933, %v932
      %v1068 = vpack.c.bf16 %v935, %v934
      %v1069 = vpack.c.bf16 %v937, %v936
      %v1070 = vpack.c.bf16 %v939, %v938
      %v1071 = vpack.c.bf16 %v941, %v940
      %v1072 = vpack.c.bf16 %v943, %v942
      %s1073 = scalar_lea.vmem %s1, 256
      %v1074 = vld [vmem:[%s1073] sm:$0xf]
      %v1075 = vld [vmem:[%s1073 + $0x4] sm:$0xf]
      %v1076 = vld [vmem:[%s1073 + $0x8] sm:$0xf]
      %v1077 = vld [vmem:[%s1073 + $0xc] sm:$0xf]
      %v1078 = vld [vmem:[%s1073 + $0x10] sm:$0xf]
      %v1079 = vld [vmem:[%s1073 + $0x14] sm:$0xf]
      %v1080 = vld [vmem:[%s1073 + $0x18] sm:$0xf]
      %v1081 = vld [vmem:[%s1073 + $0x1c] sm:$0xf]
      %v1082 = vld [vmem:[%s1073 + $0x20] sm:$0xf]
      %v1083 = vld [vmem:[%s1073 + $0x24] sm:$0xf]
      %v1084 = vld [vmem:[%s1073 + $0x28] sm:$0xf]
      %v1085 = vld [vmem:[%s1073 + $0x2c] sm:$0xf]
      %v1086 = vld [vmem:[%s1073 + $0x30] sm:$0xf]
      %v1087 = vld [vmem:[%s1073 + $0x34] sm:$0xf]
      %v1088 = vld [vmem:[%s1073 + $0x38] sm:$0xf]
      %v1089 = vld [vmem:[%s1073 + $0x3c] sm:$0xf]
      %v1106 = vunpack.c.l.b16 %v1074
      %v1107 = vunpack.c.l.b16 %v1075
      %v1108 = vunpack.c.l.b16 %v1076
      %v1109 = vunpack.c.l.b16 %v1077
      %v1110 = vunpack.c.l.b16 %v1078
      %v1111 = vunpack.c.l.b16 %v1079
      %v1112 = vunpack.c.l.b16 %v1080
      %v1113 = vunpack.c.l.b16 %v1081
      %v1114 = vunpack.c.l.b16 %v1082
      %v1115 = vunpack.c.l.b16 %v1083
      %v1116 = vunpack.c.l.b16 %v1084
      %v1117 = vunpack.c.l.b16 %v1085
      %v1118 = vunpack.c.l.b16 %v1086
      %v1119 = vunpack.c.l.b16 %v1087
      %v1120 = vunpack.c.l.b16 %v1088
      %v1121 = vunpack.c.l.b16 %v1089
      %v1122 = vpack.c.b16 %v1107, %v1106
      %v1123 = vpack.c.b16 %v1109, %v1108
      %v1124 = vpack.c.b16 %v1111, %v1110
      %v1125 = vpack.c.b16 %v1113, %v1112
      %v1126 = vpack.c.b16 %v1115, %v1114
      %v1127 = vpack.c.b16 %v1117, %v1116
      %v1128 = vpack.c.b16 %v1119, %v1118
      %v1129 = vpack.c.b16 %v1121, %v1120
      %1138 = vmatpush.bf16.msra.mxu0 %v1129
      %1139 = vmatpush.bf16.msra.mxu0 %v1128
      %1140 = vmatpush.bf16.msra.mxu0 %v1127
      %1141 = vmatpush.bf16.msra.mxu0 %v1126
      %1142 = vmatpush.bf16.msra.mxu0 %v1125
      %1143 = vmatpush.bf16.msra.mxu0 %v1124
      %1144 = vmatpush.bf16.msra.mxu0 %v1123
      %1145 = vmatpush.bf16.msra.mxu0 %v1122
      %1146 = vmatmul.bf16.gmra.mxu0 %v1065
      %v1147 = vpop.f32.mrf.mxu0
      %v1148 = vadd.f32 0.0, %v1147
      %v1149 = vpop.f32.mrf.mxu0
      %v1150 = vadd.f32 0.0, %v1149
      %1151 = vmatmul.bf16.gmra.mxu0 %v1066
      %v1152 = vpop.f32.mrf.mxu0
      %v1153 = vadd.f32 0.0, %v1152
      %v1154 = vpop.f32.mrf.mxu0
      %v1155 = vadd.f32 0.0, %v1154
      %1156 = vmatmul.bf16.gmra.mxu0 %v1067
      %v1157 = vpop.f32.mrf.mxu0
      %v1158 = vadd.f32 0.0, %v1157
      %v1159 = vpop.f32.mrf.mxu0
      %v1160 = vadd.f32 0.0, %v1159
      %1161 = vmatmul.bf16.gmra.mxu0 %v1068
      %v1162 = vpop.f32.mrf.mxu0
      %v1163 = vadd.f32 0.0, %v1162
      %v1164 = vpop.f32.mrf.mxu0
      %v1165 = vadd.f32 0.0, %v1164
      %1166 = vmatmul.bf16.gmra.mxu0 %v1069
      %v1167 = vpop.f32.mrf.mxu0
      %v1168 = vadd.f32 0.0, %v1167
      %v1169 = vpop.f32.mrf.mxu0
      %v1170 = vadd.f32 0.0, %v1169
      %1171 = vmatmul.bf16.gmra.mxu0 %v1070
      %v1172 = vpop.f32.mrf.mxu0
      %v1173 = vadd.f32 0.0, %v1172
      %v1174 = vpop.f32.mrf.mxu0
      %v1175 = vadd.f32 0.0, %v1174
      %1176 = vmatmul.bf16.gmra.mxu0 %v1071
      %v1177 = vpop.f32.mrf.mxu0
      %v1178 = vadd.f32 0.0, %v1177
      %v1179 = vpop.f32.mrf.mxu0
      %v1180 = vadd.f32 0.0, %v1179
      %1181 = vmatmul.bf16.gmra.mxu0 %v1072
      %v1182 = vpop.f32.mrf.mxu0
      %v1183 = vadd.f32 0.0, %v1182
      %v1184 = vpop.f32.mrf.mxu0
      %v1185 = vadd.f32 0.0, %v1184
      %1186 = vdwg.mxu0
      %v1203 = vunpack.c.l.b16 %v1049
      %v1204 = vunpack.c.l.b16 %v1050
      %v1205 = vunpack.c.l.b16 %v1051
      %v1206 = vunpack.c.l.b16 %v1052
      %v1207 = vunpack.c.l.b16 %v1053
      %v1208 = vunpack.c.l.b16 %v1054
      %v1209 = vunpack.c.l.b16 %v1055
      %v1210 = vunpack.c.l.b16 %v1056
      %v1211 = vunpack.c.l.b16 %v1057
      %v1212 = vunpack.c.l.b16 %v1058
      %v1213 = vunpack.c.l.b16 %v1059
      %v1214 = vunpack.c.l.b16 %v1060
      %v1215 = vunpack.c.l.b16 %v1061
      %v1216 = vunpack.c.l.b16 %v1062
      %v1217 = vunpack.c.l.b16 %v1063
      %v1218 = vunpack.c.l.b16 %v1064
      %v1219 = vpack.c.b16 %v1204, %v1203
      %v1220 = vpack.c.b16 %v1206, %v1205
      %v1221 = vpack.c.b16 %v1208, %v1207
      %v1222 = vpack.c.b16 %v1210, %v1209
      %v1223 = vpack.c.b16 %v1212, %v1211
      %v1224 = vpack.c.b16 %v1214, %v1213
      %v1225 = vpack.c.b16 %v1216, %v1215
      %v1226 = vpack.c.b16 %v1218, %v1217
      %1235 = vmatpush.bf16.msra.mxu0 %v1226
      %1236 = vmatpush.bf16.msra.mxu0 %v1225
      %1237 = vmatpush.bf16.msra.mxu0 %v1224
      %1238 = vmatpush.bf16.msra.mxu0 %v1223
      %1239 = vmatpush.bf16.msra.mxu0 %v1222
      %1240 = vmatpush.bf16.msra.mxu0 %v1221
      %1241 = vmatpush.bf16.msra.mxu0 %v1220
      %1242 = vmatpush.bf16.msra.mxu0 %v1219
      %1243 = vmatmul.bf16.gmra.mxu0 %v1040
      %v1244 = vpop.f32.mrf.mxu0
      %v1245 = vadd.f32 %v1148, %v1244
      %v1246 = vpop.f32.mrf.mxu0
      %v1247 = vadd.f32 %v1150, %v1246
      %1248 = vmatmul.bf16.gmra.mxu0 %v1041
      %v1249 = vpop.f32.mrf.mxu0
      %v1250 = vadd.f32 %v1153, %v1249
      %v1251 = vpop.f32.mrf.mxu0
      %v1252 = vadd.f32 %v1155, %v1251
      %1253 = vmatmul.bf16.gmra.mxu0 %v1042
      %v1254 = vpop.f32.mrf.mxu0
      %v1255 = vadd.f32 %v1158, %v1254
      %v1256 = vpop.f32.mrf.mxu0
      %v1257 = vadd.f32 %v1160, %v1256
      %1258 = vmatmul.bf16.gmra.mxu0 %v1043
      %v1259 = vpop.f32.mrf.mxu0
      %v1260 = vadd.f32 %v1163, %v1259
      %v1261 = vpop.f32.mrf.mxu0
      %v1262 = vadd.f32 %v1165, %v1261
      %1263 = vmatmul.bf16.gmra.mxu0 %v1044
      %v1264 = vpop.f32.mrf.mxu0
      %v1265 = vadd.f32 %v1168, %v1264
      %v1266 = vpop.f32.mrf.mxu0
      %v1267 = vadd.f32 %v1170, %v1266
      %1268 = vmatmul.bf16.gmra.mxu0 %v1045
      %v1269 = vpop.f32.mrf.mxu0
      %v1270 = vadd.f32 %v1173, %v1269
      %v1271 = vpop.f32.mrf.mxu0
      %v1272 = vadd.f32 %v1175, %v1271
      %1273 = vmatmul.bf16.gmra.mxu0 %v1046
      %v1274 = vpop.f32.mrf.mxu0
      %v1275 = vadd.f32 %v1178, %v1274
      %v1276 = vpop.f32.mrf.mxu0
      %v1277 = vadd.f32 %v1180, %v1276
      %1278 = vmatmul.bf16.gmra.mxu0 %v1047
      %v1279 = vpop.f32.mrf.mxu0
      %v1280 = vadd.f32 %v1183, %v1279
      %v1281 = vpop.f32.mrf.mxu0
      %v1282 = vadd.f32 %v1185, %v1281
      %1283 = vdwg.mxu0
      %v1284 = vpack.c.bf16 %v1025, %v1024
      %v1285 = vpack.c.bf16 %v1027, %v1026
      %v1286 = vpack.c.bf16 %v1029, %v1028
      %v1287 = vpack.c.bf16 %v1031, %v1030
      %v1288 = vpack.c.bf16 %v1033, %v1032
      %v1289 = vpack.c.bf16 %v1035, %v1034
      %v1290 = vpack.c.bf16 %v1037, %v1036
      %v1291 = vpack.c.bf16 %v1039, %v1038
      %s1292 = scalar_lea.vmem %s1, 320
      %v1293 = vld [vmem:[%s1292] sm:$0xf]
      %v1294 = vld [vmem:[%s1292 + $0x4] sm:$0xf]
      %v1295 = vld [vmem:[%s1292 + $0x8] sm:$0xf]
      %v1296 = vld [vmem:[%s1292 + $0xc] sm:$0xf]
      %v1297 = vld [vmem:[%s1292 + $0x10] sm:$0xf]
      %v1298 = vld [vmem:[%s1292 + $0x14] sm:$0xf]
      %v1299 = vld [vmem:[%s1292 + $0x18] sm:$0xf]
      %v1300 = vld [vmem:[%s1292 + $0x1c] sm:$0xf]
      %v1301 = vld [vmem:[%s1292 + $0x20] sm:$0xf]
      %v1302 = vld [vmem:[%s1292 + $0x24] sm:$0xf]
      %v1303 = vld [vmem:[%s1292 + $0x28] sm:$0xf]
      %v1304 = vld [vmem:[%s1292 + $0x2c] sm:$0xf]
      %v1305 = vld [vmem:[%s1292 + $0x30] sm:$0xf]
      %v1306 = vld [vmem:[%s1292 + $0x34] sm:$0xf]
      %v1307 = vld [vmem:[%s1292 + $0x38] sm:$0xf]
      %v1308 = vld [vmem:[%s1292 + $0x3c] sm:$0xf]
      %v1325 = vunpack.c.l.b16 %v1293
      %v1326 = vunpack.c.l.b16 %v1294
      %v1327 = vunpack.c.l.b16 %v1295
      %v1328 = vunpack.c.l.b16 %v1296
      %v1329 = vunpack.c.l.b16 %v1297
      %v1330 = vunpack.c.l.b16 %v1298
      %v1331 = vunpack.c.l.b16 %v1299
      %v1332 = vunpack.c.l.b16 %v1300
      %v1333 = vunpack.c.l.b16 %v1301
      %v1334 = vunpack.c.l.b16 %v1302
      %v1335 = vunpack.c.l.b16 %v1303
      %v1336 = vunpack.c.l.b16 %v1304
      %v1337 = vunpack.c.l.b16 %v1305
      %v1338 = vunpack.c.l.b16 %v1306
      %v1339 = vunpack.c.l.b16 %v1307
      %v1340 = vunpack.c.l.b16 %v1308
      %v1341 = vpack.c.b16 %v1326, %v1325
      %v1342 = vpack.c.b16 %v1328, %v1327
      %v1343 = vpack.c.b16 %v1330, %v1329
      %v1344 = vpack.c.b16 %v1332, %v1331
      %v1345 = vpack.c.b16 %v1334, %v1333
      %v1346 = vpack.c.b16 %v1336, %v1335
      %v1347 = vpack.c.b16 %v1338, %v1337
      %v1348 = vpack.c.b16 %v1340, %v1339
      %1357 = vmatpush.bf16.msra.mxu0 %v1348
      %1358 = vmatpush.bf16.msra.mxu0 %v1347
      %1359 = vmatpush.bf16.msra.mxu0 %v1346
      %1360 = vmatpush.bf16.msra.mxu0 %v1345
      %1361 = vmatpush.bf16.msra.mxu0 %v1344
      %1362 = vmatpush.bf16.msra.mxu0 %v1343
      %1363 = vmatpush.bf16.msra.mxu0 %v1342
      %1364 = vmatpush.bf16.msra.mxu0 %v1341
      %1365 = vmatmul.bf16.gmra.mxu0 %v1284
      %v1366 = vpop.f32.mrf.mxu0
      %v1367 = vadd.f32 0.0, %v1366
      %v1368 = vpop.f32.mrf.mxu0
      %v1369 = vadd.f32 0.0, %v1368
      %1370 = vmatmul.bf16.gmra.mxu0 %v1285
      %v1371 = vpop.f32.mrf.mxu0
      %v1372 = vadd.f32 0.0, %v1371
      %v1373 = vpop.f32.mrf.mxu0
      %v1374 = vadd.f32 0.0, %v1373
      %1375 = vmatmul.bf16.gmra.mxu0 %v1286
      %v1376 = vpop.f32.mrf.mxu0
      %v1377 = vadd.f32 0.0, %v1376
      %v1378 = vpop.f32.mrf.mxu0
      %v1379 = vadd.f32 0.0, %v1378
      %1380 = vmatmul.bf16.gmra.mxu0 %v1287
      %v1381 = vpop.f32.mrf.mxu0
      %v1382 = vadd.f32 0.0, %v1381
      %v1383 = vpop.f32.mrf.mxu0
      %v1384 = vadd.f32 0.0, %v1383
      %1385 = vmatmul.bf16.gmra.mxu0 %v1288
      %v1386 = vpop.f32.mrf.mxu0
      %v1387 = vadd.f32 0.0, %v1386
      %v1388 = vpop.f32.mrf.mxu0
      %v1389 = vadd.f32 0.0, %v1388
      %1390 = vmatmul.bf16.gmra.mxu0 %v1289
      %v1391 = vpop.f32.mrf.mxu0
      %v1392 = vadd.f32 0.0, %v1391
      %v1393 = vpop.f32.mrf.mxu0
      %v1394 = vadd.f32 0.0, %v1393
      %1395 = vmatmul.bf16.gmra.mxu0 %v1290
      %v1396 = vpop.f32.mrf.mxu0
      %v1397 = vadd.f32 0.0, %v1396
      %v1398 = vpop.f32.mrf.mxu0
      %v1399 = vadd.f32 0.0, %v1398
      %1400 = vmatmul.bf16.gmra.mxu0 %v1291
      %v1401 = vpop.f32.mrf.mxu0
      %v1402 = vadd.f32 0.0, %v1401
      %v1403 = vpop.f32.mrf.mxu0
      %v1404 = vadd.f32 0.0, %v1403
      %1405 = vdwg.mxu0
      %v1406 = vadd.f32 %v1245, %v1367
      %v1407 = vadd.f32 %v1247, %v1369
      %v1408 = vadd.f32 %v1250, %v1372
      %v1409 = vadd.f32 %v1252, %v1374
      %v1410 = vadd.f32 %v1255, %v1377
      %v1411 = vadd.f32 %v1257, %v1379
      %v1412 = vadd.f32 %v1260, %v1382
      %v1413 = vadd.f32 %v1262, %v1384
      %v1414 = vadd.f32 %v1265, %v1387
      %v1415 = vadd.f32 %v1267, %v1389
      %v1416 = vadd.f32 %v1270, %v1392
      %v1417 = vadd.f32 %v1272, %v1394
      %v1418 = vadd.f32 %v1275, %v1397
      %v1419 = vadd.f32 %v1277, %v1399
      %v1420 = vadd.f32 %v1280, %v1402
      %v1421 = vadd.f32 %v1282, %v1404
      %v1422 = vld [vmem:[%s2 + $0x1] sm:$0x1]
      %v1423 = vperm.slane %v1422, 0
      %v1424 = vadd.f32 %v1406, %v1423
      %v1425 = vadd.f32 %v1407, %v1423
      %v1426 = vadd.f32 %v1408, %v1423
      %v1427 = vadd.f32 %v1409, %v1423
      %v1428 = vadd.f32 %v1410, %v1423
      %v1429 = vadd.f32 %v1411, %v1423
      %v1430 = vadd.f32 %v1412, %v1423
      %v1431 = vadd.f32 %v1413, %v1423
      %v1432 = vadd.f32 %v1414, %v1423
      %v1433 = vadd.f32 %v1415, %v1423
      %v1434 = vadd.f32 %v1416, %v1423
      %v1435 = vadd.f32 %v1417, %v1423
      %v1436 = vadd.f32 %v1418, %v1423
      %v1437 = vadd.f32 %v1419, %v1423
      %v1438 = vadd.f32 %v1420, %v1423
      %v1439 = vadd.f32 %v1421, %v1423
      %v1440 = vmax.f32 %v1424, 0.0
      %v1441 = vmax.f32 %v1425, 0.0
      %v1442 = vmax.f32 %v1426, 0.0
      %v1443 = vmax.f32 %v1427, 0.0
      %v1444 = vmax.f32 %v1428, 0.0
      %v1445 = vmax.f32 %v1429, 0.0
      %v1446 = vmax.f32 %v1430, 0.0
      %v1447 = vmax.f32 %v1431, 0.0
      %v1448 = vmax.f32 %v1432, 0.0
      %v1449 = vmax.f32 %v1433, 0.0
      %v1450 = vmax.f32 %v1434, 0.0
      %v1451 = vmax.f32 %v1435, 0.0
      %v1452 = vmax.f32 %v1436, 0.0
      %v1453 = vmax.f32 %v1437, 0.0
      %v1454 = vmax.f32 %v1438, 0.0
      %v1455 = vmax.f32 %v1439, 0.0
      %v1456 = vrot.slane %v1440, 7
      %v1457 = vrot.slane %v1441, 7
      %v1458 = vrot.slane %v1442, 7
      %v1459 = vrot.slane %v1443, 7
      %v1460 = vrot.slane %v1444, 7
      %v1461 = vrot.slane %v1445, 7
      %v1462 = vrot.slane %v1446, 7
      %v1463 = vrot.slane %v1447, 7
      %v1464 = vrot.slane %v1448, 7
      %v1465 = vrot.slane %v1449, 7
      %v1466 = vrot.slane %v1450, 7
      %v1467 = vrot.slane %v1451, 7
      %v1468 = vrot.slane %v1452, 7
      %v1469 = vrot.slane %v1453, 7
      %v1470 = vrot.slane %v1454, 7
      %v1471 = vrot.slane %v1455, 7
      %v1472 = vsel %vm447, %v1470, %v1471
      %v1473 = vsel %vm447, %v1469, %v1470
      %v1474 = vsel %vm447, %v1468, %v1469
      %v1475 = vsel %vm447, %v1467, %v1468
      %v1476 = vsel %vm447, %v1466, %v1467
      %v1477 = vsel %vm447, %v1465, %v1466
      %v1478 = vsel %vm447, %v1464, %v1465
      %v1479 = vsel %vm447, %v1463, %v1464
      %v1480 = vsel %vm447, %v1462, %v1463
      %v1481 = vsel %vm447, %v1461, %v1462
      %v1482 = vsel %vm447, %v1460, %v1461
      %v1483 = vsel %vm447, %v1459, %v1460
      %v1484 = vsel %vm447, %v1458, %v1459
      %v1485 = vsel %vm447, %v1457, %v1458
      %v1486 = vsel %vm447, %v1456, %v1457
      %v1487 = vsel %vm447, %v1471, %v1456
      %v1488 = vsel %vm399, 0.0, %v1487
      %v1489 = vsel %vm400, 0.0, %v1486
      %v1490 = vsel %vm401, 0.0, %v1485
      %v1491 = vsel %vm402, 0.0, %v1484
      %v1492 = vsel %vm403, 0.0, %v1483
      %v1493 = vsel %vm404, 0.0, %v1482
      %v1494 = vsel %vm405, 0.0, %v1481
      %v1495 = vsel %vm406, 0.0, %v1480
      %v1496 = vsel %vm407, 0.0, %v1479
      %v1497 = vsel %vm408, 0.0, %v1478
      %v1498 = vsel %vm409, 0.0, %v1477
      %v1499 = vsel %vm410, 0.0, %v1476
      %v1500 = vsel %vm411, 0.0, %v1475
      %v1501 = vsel %vm412, 0.0, %v1474
      %v1502 = vsel %vm413, 0.0, %v1473
      %v1503 = vsel %vm414, 0.0, %v1472
      %v1504 = vrot.slane %v1440, 1
      %v1505 = vrot.slane %v1441, 1
      %v1506 = vrot.slane %v1442, 1
      %v1507 = vrot.slane %v1443, 1
      %v1508 = vrot.slane %v1444, 1
      %v1509 = vrot.slane %v1445, 1
      %v1510 = vrot.slane %v1446, 1
      %v1511 = vrot.slane %v1447, 1
      %v1512 = vrot.slane %v1448, 1
      %v1513 = vrot.slane %v1449, 1
      %v1514 = vrot.slane %v1450, 1
      %v1515 = vrot.slane %v1451, 1
      %v1516 = vrot.slane %v1452, 1
      %v1517 = vrot.slane %v1453, 1
      %v1518 = vrot.slane %v1454, 1
      %v1519 = vrot.slane %v1455, 1
      %v1520 = vsel %vm496, %v1518, %v1519
      %v1521 = vsel %vm496, %v1517, %v1518
      %v1522 = vsel %vm496, %v1516, %v1517
      %v1523 = vsel %vm496, %v1515, %v1516
      %v1524 = vsel %vm496, %v1514, %v1515
      %v1525 = vsel %vm496, %v1513, %v1514
      %v1526 = vsel %vm496, %v1512, %v1513
      %v1527 = vsel %vm496, %v1511, %v1512
      %v1528 = vsel %vm496, %v1510, %v1511
      %v1529 = vsel %vm496, %v1509, %v1510
      %v1530 = vsel %vm496, %v1508, %v1509
      %v1531 = vsel %vm496, %v1507, %v1508
      %v1532 = vsel %vm496, %v1506, %v1507
      %v1533 = vsel %vm496, %v1505, %v1506
      %v1534 = vsel %vm496, %v1504, %v1505
      %v1535 = vsel %vm496, %v1519, %v1504
      %v1536 = vsel %vm415, 0.0, %v1534
      %v1537 = vsel %vm416, 0.0, %v1533
      %v1538 = vsel %vm417, 0.0, %v1532
      %v1539 = vsel %vm418, 0.0, %v1531
      %v1540 = vsel %vm419, 0.0, %v1530
      %v1541 = vsel %vm420, 0.0, %v1529
      %v1542 = vsel %vm421, 0.0, %v1528
      %v1543 = vsel %vm422, 0.0, %v1527
      %v1544 = vsel %vm423, 0.0, %v1526
      %v1545 = vsel %vm424, 0.0, %v1525
      %v1546 = vsel %vm425, 0.0, %v1524
      %v1547 = vsel %vm426, 0.0, %v1523
      %v1548 = vsel %vm427, 0.0, %v1522
      %v1549 = vsel %vm428, 0.0, %v1521
      %v1550 = vsel %vm429, 0.0, %v1520
      %v1551 = vsel %vm430, 0.0, %v1535
      %v1552 = vpack.c.bf16 %v1489, %v1488
      %v1553 = vpack.c.bf16 %v1491, %v1490
      %v1554 = vpack.c.bf16 %v1493, %v1492
      %v1555 = vpack.c.bf16 %v1495, %v1494
      %v1556 = vpack.c.bf16 %v1497, %v1496
      %v1557 = vpack.c.bf16 %v1499, %v1498
      %v1558 = vpack.c.bf16 %v1501, %v1500
      %v1559 = vpack.c.bf16 %v1503, %v1502
      %s1560 = scalar_lea.vmem %s1, 384
      %v1561 = vld [vmem:[%s1560] sm:$0xf]
      %v1562 = vld [vmem:[%s1560 + $0x4] sm:$0xf]
      %v1563 = vld [vmem:[%s1560 + $0x8] sm:$0xf]
      %v1564 = vld [vmem:[%s1560 + $0xc] sm:$0xf]
      %v1565 = vld [vmem:[%s1560 + $0x10] sm:$0xf]
      %v1566 = vld [vmem:[%s1560 + $0x14] sm:$0xf]
      %v1567 = vld [vmem:[%s1560 + $0x18] sm:$0xf]
      %v1568 = vld [vmem:[%s1560 + $0x1c] sm:$0xf]
      %v1569 = vld [vmem:[%s1560 + $0x20] sm:$0xf]
      %v1570 = vld [vmem:[%s1560 + $0x24] sm:$0xf]
      %v1571 = vld [vmem:[%s1560 + $0x28] sm:$0xf]
      %v1572 = vld [vmem:[%s1560 + $0x2c] sm:$0xf]
      %v1573 = vld [vmem:[%s1560 + $0x30] sm:$0xf]
      %v1574 = vld [vmem:[%s1560 + $0x34] sm:$0xf]
      %v1575 = vld [vmem:[%s1560 + $0x38] sm:$0xf]
      %v1576 = vld [vmem:[%s1560 + $0x3c] sm:$0xf]
      %v1577 = vpack.c.bf16 %v1441, %v1440
      %v1578 = vpack.c.bf16 %v1443, %v1442
      %v1579 = vpack.c.bf16 %v1445, %v1444
      %v1580 = vpack.c.bf16 %v1447, %v1446
      %v1581 = vpack.c.bf16 %v1449, %v1448
      %v1582 = vpack.c.bf16 %v1451, %v1450
      %v1583 = vpack.c.bf16 %v1453, %v1452
      %v1584 = vpack.c.bf16 %v1455, %v1454
      %s1585 = scalar_lea.vmem %s1, 448
      %v1586 = vld [vmem:[%s1585] sm:$0xf]
      %v1587 = vld [vmem:[%s1585 + $0x4] sm:$0xf]
      %v1588 = vld [vmem:[%s1585 + $0x8] sm:$0xf]
      %v1589 = vld [vmem:[%s1585 + $0xc] sm:$0xf]
      %v1590 = vld [vmem:[%s1585 + $0x10] sm:$0xf]
      %v1591 = vld [vmem:[%s1585 + $0x14] sm:$0xf]
      %v1592 = vld [vmem:[%s1585 + $0x18] sm:$0xf]
      %v1593 = vld [vmem:[%s1585 + $0x1c] sm:$0xf]
      %v1594 = vld [vmem:[%s1585 + $0x20] sm:$0xf]
      %v1595 = vld [vmem:[%s1585 + $0x24] sm:$0xf]
      %v1596 = vld [vmem:[%s1585 + $0x28] sm:$0xf]
      %v1597 = vld [vmem:[%s1585 + $0x2c] sm:$0xf]
      %v1598 = vld [vmem:[%s1585 + $0x30] sm:$0xf]
      %v1599 = vld [vmem:[%s1585 + $0x34] sm:$0xf]
      %v1600 = vld [vmem:[%s1585 + $0x38] sm:$0xf]
      %v1601 = vld [vmem:[%s1585 + $0x3c] sm:$0xf]
      %v1618 = vunpack.c.l.b16 %v1586
      %v1619 = vunpack.c.l.b16 %v1587
      %v1620 = vunpack.c.l.b16 %v1588
      %v1621 = vunpack.c.l.b16 %v1589
      %v1622 = vunpack.c.l.b16 %v1590
      %v1623 = vunpack.c.l.b16 %v1591
      %v1624 = vunpack.c.l.b16 %v1592
      %v1625 = vunpack.c.l.b16 %v1593
      %v1626 = vunpack.c.l.b16 %v1594
      %v1627 = vunpack.c.l.b16 %v1595
      %v1628 = vunpack.c.l.b16 %v1596
      %v1629 = vunpack.c.l.b16 %v1597
      %v1630 = vunpack.c.l.b16 %v1598
      %v1631 = vunpack.c.l.b16 %v1599
      %v1632 = vunpack.c.l.b16 %v1600
      %v1633 = vunpack.c.l.b16 %v1601
      %v1634 = vpack.c.b16 %v1619, %v1618
      %v1635 = vpack.c.b16 %v1621, %v1620
      %v1636 = vpack.c.b16 %v1623, %v1622
      %v1637 = vpack.c.b16 %v1625, %v1624
      %v1638 = vpack.c.b16 %v1627, %v1626
      %v1639 = vpack.c.b16 %v1629, %v1628
      %v1640 = vpack.c.b16 %v1631, %v1630
      %v1641 = vpack.c.b16 %v1633, %v1632
      %1650 = vmatpush.bf16.msra.mxu0 %v1641
      %1651 = vmatpush.bf16.msra.mxu0 %v1640
      %1652 = vmatpush.bf16.msra.mxu0 %v1639
      %1653 = vmatpush.bf16.msra.mxu0 %v1638
      %1654 = vmatpush.bf16.msra.mxu0 %v1637
      %1655 = vmatpush.bf16.msra.mxu0 %v1636
      %1656 = vmatpush.bf16.msra.mxu0 %v1635
      %1657 = vmatpush.bf16.msra.mxu0 %v1634
      %1658 = vmatmul.bf16.gmra.mxu0 %v1577
      %v1659 = vpop.f32.mrf.mxu0
      %v1660 = vadd.f32 0.0, %v1659
      %v1661 = vpop.f32.mrf.mxu0
      %v1662 = vadd.f32 0.0, %v1661
      %1663 = vmatmul.bf16.gmra.mxu0 %v1578
      %v1664 = vpop.f32.mrf.mxu0
      %v1665 = vadd.f32 0.0, %v1664
      %v1666 = vpop.f32.mrf.mxu0
      %v1667 = vadd.f32 0.0, %v1666
      %1668 = vmatmul.bf16.gmra.mxu0 %v1579
      %v1669 = vpop.f32.mrf.mxu0
      %v1670 = vadd.f32 0.0, %v1669
      %v1671 = vpop.f32.mrf.mxu0
      %v1672 = vadd.f32 0.0, %v1671
      %1673 = vmatmul.bf16.gmra.mxu0 %v1580
      %v1674 = vpop.f32.mrf.mxu0
      %v1675 = vadd.f32 0.0, %v1674
      %v1676 = vpop.f32.mrf.mxu0
      %v1677 = vadd.f32 0.0, %v1676
      %1678 = vmatmul.bf16.gmra.mxu0 %v1581
      %v1679 = vpop.f32.mrf.mxu0
      %v1680 = vadd.f32 0.0, %v1679
      %v1681 = vpop.f32.mrf.mxu0
      %v1682 = vadd.f32 0.0, %v1681
      %1683 = vmatmul.bf16.gmra.mxu0 %v1582
      %v1684 = vpop.f32.mrf.mxu0
      %v1685 = vadd.f32 0.0, %v1684
      %v1686 = vpop.f32.mrf.mxu0
      %v1687 = vadd.f32 0.0, %v1686
      %1688 = vmatmul.bf16.gmra.mxu0 %v1583
      %v1689 = vpop.f32.mrf.mxu0
      %v1690 = vadd.f32 0.0, %v1689
      %v1691 = vpop.f32.mrf.mxu0
      %v1692 = vadd.f32 0.0, %v1691
      %1693 = vmatmul.bf16.gmra.mxu0 %v1584
      %v1694 = vpop.f32.mrf.mxu0
      %v1695 = vadd.f32 0.0, %v1694
      %v1696 = vpop.f32.mrf.mxu0
      %v1697 = vadd.f32 0.0, %v1696
      %1698 = vdwg.mxu0
      %v1715 = vunpack.c.l.b16 %v1561
      %v1716 = vunpack.c.l.b16 %v1562
      %v1717 = vunpack.c.l.b16 %v1563
      %v1718 = vunpack.c.l.b16 %v1564
      %v1719 = vunpack.c.l.b16 %v1565
      %v1720 = vunpack.c.l.b16 %v1566
      %v1721 = vunpack.c.l.b16 %v1567
      %v1722 = vunpack.c.l.b16 %v1568
      %v1723 = vunpack.c.l.b16 %v1569
      %v1724 = vunpack.c.l.b16 %v1570
      %v1725 = vunpack.c.l.b16 %v1571
      %v1726 = vunpack.c.l.b16 %v1572
      %v1727 = vunpack.c.l.b16 %v1573
      %v1728 = vunpack.c.l.b16 %v1574
      %v1729 = vunpack.c.l.b16 %v1575
      %v1730 = vunpack.c.l.b16 %v1576
      %v1731 = vpack.c.b16 %v1716, %v1715
      %v1732 = vpack.c.b16 %v1718, %v1717
      %v1733 = vpack.c.b16 %v1720, %v1719
      %v1734 = vpack.c.b16 %v1722, %v1721
      %v1735 = vpack.c.b16 %v1724, %v1723
      %v1736 = vpack.c.b16 %v1726, %v1725
      %v1737 = vpack.c.b16 %v1728, %v1727
      %v1738 = vpack.c.b16 %v1730, %v1729
      %1747 = vmatpush.bf16.msra.mxu0 %v1738
      %1748 = vmatpush.bf16.msra.mxu0 %v1737
      %1749 = vmatpush.bf16.msra.mxu0 %v1736
      %1750 = vmatpush.bf16.msra.mxu0 %v1735
      %1751 = vmatpush.bf16.msra.mxu0 %v1734
      %1752 = vmatpush.bf16.msra.mxu0 %v1733
      %1753 = vmatpush.bf16.msra.mxu0 %v1732
      %1754 = vmatpush.bf16.msra.mxu0 %v1731
      %1755 = vmatmul.bf16.gmra.mxu0 %v1552
      %v1756 = vpop.f32.mrf.mxu0
      %v1757 = vadd.f32 %v1660, %v1756
      %v1758 = vpop.f32.mrf.mxu0
      %v1759 = vadd.f32 %v1662, %v1758
      %1760 = vmatmul.bf16.gmra.mxu0 %v1553
      %v1761 = vpop.f32.mrf.mxu0
      %v1762 = vadd.f32 %v1665, %v1761
      %v1763 = vpop.f32.mrf.mxu0
      %v1764 = vadd.f32 %v1667, %v1763
      %1765 = vmatmul.bf16.gmra.mxu0 %v1554
      %v1766 = vpop.f32.mrf.mxu0
      %v1767 = vadd.f32 %v1670, %v1766
      %v1768 = vpop.f32.mrf.mxu0
      %v1769 = vadd.f32 %v1672, %v1768
      %1770 = vmatmul.bf16.gmra.mxu0 %v1555
      %v1771 = vpop.f32.mrf.mxu0
      %v1772 = vadd.f32 %v1675, %v1771
      %v1773 = vpop.f32.mrf.mxu0
      %v1774 = vadd.f32 %v1677, %v1773
      %1775 = vmatmul.bf16.gmra.mxu0 %v1556
      %v1776 = vpop.f32.mrf.mxu0
      %v1777 = vadd.f32 %v1680, %v1776
      %v1778 = vpop.f32.mrf.mxu0
      %v1779 = vadd.f32 %v1682, %v1778
      %1780 = vmatmul.bf16.gmra.mxu0 %v1557
      %v1781 = vpop.f32.mrf.mxu0
      %v1782 = vadd.f32 %v1685, %v1781
      %v1783 = vpop.f32.mrf.mxu0
      %v1784 = vadd.f32 %v1687, %v1783
      %1785 = vmatmul.bf16.gmra.mxu0 %v1558
      %v1786 = vpop.f32.mrf.mxu0
      %v1787 = vadd.f32 %v1690, %v1786
      %v1788 = vpop.f32.mrf.mxu0
      %v1789 = vadd.f32 %v1692, %v1788
      %1790 = vmatmul.bf16.gmra.mxu0 %v1559
      %v1791 = vpop.f32.mrf.mxu0
      %v1792 = vadd.f32 %v1695, %v1791
      %v1793 = vpop.f32.mrf.mxu0
      %v1794 = vadd.f32 %v1697, %v1793
      %1795 = vdwg.mxu0
      %v1796 = vpack.c.bf16 %v1537, %v1536
      %v1797 = vpack.c.bf16 %v1539, %v1538
      %v1798 = vpack.c.bf16 %v1541, %v1540
      %v1799 = vpack.c.bf16 %v1543, %v1542
      %v1800 = vpack.c.bf16 %v1545, %v1544
      %v1801 = vpack.c.bf16 %v1547, %v1546
      %v1802 = vpack.c.bf16 %v1549, %v1548
      %v1803 = vpack.c.bf16 %v1551, %v1550
      %s1804 = scalar_lea.vmem %s1, 512
      %v1805 = vld [vmem:[%s1804] sm:$0xf]
      %v1806 = vld [vmem:[%s1804 + $0x4] sm:$0xf]
      %v1807 = vld [vmem:[%s1804 + $0x8] sm:$0xf]
      %v1808 = vld [vmem:[%s1804 + $0xc] sm:$0xf]
      %v1809 = vld [vmem:[%s1804 + $0x10] sm:$0xf]
      %v1810 = vld [vmem:[%s1804 + $0x14] sm:$0xf]
      %v1811 = vld [vmem:[%s1804 + $0x18] sm:$0xf]
      %v1812 = vld [vmem:[%s1804 + $0x1c] sm:$0xf]
      %v1813 = vld [vmem:[%s1804 + $0x20] sm:$0xf]
      %v1814 = vld [vmem:[%s1804 + $0x24] sm:$0xf]
      %v1815 = vld [vmem:[%s1804 + $0x28] sm:$0xf]
      %v1816 = vld [vmem:[%s1804 + $0x2c] sm:$0xf]
      %v1817 = vld [vmem:[%s1804 + $0x30] sm:$0xf]
      %v1818 = vld [vmem:[%s1804 + $0x34] sm:$0xf]
      %v1819 = vld [vmem:[%s1804 + $0x38] sm:$0xf]
      %v1820 = vld [vmem:[%s1804 + $0x3c] sm:$0xf]
      %v1837 = vunpack.c.l.b16 %v1805
      %v1838 = vunpack.c.l.b16 %v1806
      %v1839 = vunpack.c.l.b16 %v1807
      %v1840 = vunpack.c.l.b16 %v1808
      %v1841 = vunpack.c.l.b16 %v1809
      %v1842 = vunpack.c.l.b16 %v1810
      %v1843 = vunpack.c.l.b16 %v1811
      %v1844 = vunpack.c.l.b16 %v1812
      %v1845 = vunpack.c.l.b16 %v1813
      %v1846 = vunpack.c.l.b16 %v1814
      %v1847 = vunpack.c.l.b16 %v1815
      %v1848 = vunpack.c.l.b16 %v1816
      %v1849 = vunpack.c.l.b16 %v1817
      %v1850 = vunpack.c.l.b16 %v1818
      %v1851 = vunpack.c.l.b16 %v1819
      %v1852 = vunpack.c.l.b16 %v1820
      %v1853 = vpack.c.b16 %v1838, %v1837
      %v1854 = vpack.c.b16 %v1840, %v1839
      %v1855 = vpack.c.b16 %v1842, %v1841
      %v1856 = vpack.c.b16 %v1844, %v1843
      %v1857 = vpack.c.b16 %v1846, %v1845
      %v1858 = vpack.c.b16 %v1848, %v1847
      %v1859 = vpack.c.b16 %v1850, %v1849
      %v1860 = vpack.c.b16 %v1852, %v1851
      %1869 = vmatpush.bf16.msra.mxu0 %v1860
      %1870 = vmatpush.bf16.msra.mxu0 %v1859
      %1871 = vmatpush.bf16.msra.mxu0 %v1858
      %1872 = vmatpush.bf16.msra.mxu0 %v1857
      %1873 = vmatpush.bf16.msra.mxu0 %v1856
      %1874 = vmatpush.bf16.msra.mxu0 %v1855
      %1875 = vmatpush.bf16.msra.mxu0 %v1854
      %1876 = vmatpush.bf16.msra.mxu0 %v1853
      %1877 = vmatmul.bf16.gmra.mxu0 %v1796
      %v1878 = vpop.f32.mrf.mxu0
      %v1879 = vadd.f32 0.0, %v1878
      %v1880 = vpop.f32.mrf.mxu0
      %v1881 = vadd.f32 0.0, %v1880
      %1882 = vmatmul.bf16.gmra.mxu0 %v1797
      %v1883 = vpop.f32.mrf.mxu0
      %v1884 = vadd.f32 0.0, %v1883
      %v1885 = vpop.f32.mrf.mxu0
      %v1886 = vadd.f32 0.0, %v1885
      %1887 = vmatmul.bf16.gmra.mxu0 %v1798
      %v1888 = vpop.f32.mrf.mxu0
      %v1889 = vadd.f32 0.0, %v1888
      %v1890 = vpop.f32.mrf.mxu0
      %v1891 = vadd.f32 0.0, %v1890
      %1892 = vmatmul.bf16.gmra.mxu0 %v1799
      %v1893 = vpop.f32.mrf.mxu0
      %v1894 = vadd.f32 0.0, %v1893
      %v1895 = vpop.f32.mrf.mxu0
      %v1896 = vadd.f32 0.0, %v1895
      %1897 = vmatmul.bf16.gmra.mxu0 %v1800
      %v1898 = vpop.f32.mrf.mxu0
      %v1899 = vadd.f32 0.0, %v1898
      %v1900 = vpop.f32.mrf.mxu0
      %v1901 = vadd.f32 0.0, %v1900
      %1902 = vmatmul.bf16.gmra.mxu0 %v1801
      %v1903 = vpop.f32.mrf.mxu0
      %v1904 = vadd.f32 0.0, %v1903
      %v1905 = vpop.f32.mrf.mxu0
      %v1906 = vadd.f32 0.0, %v1905
      %1907 = vmatmul.bf16.gmra.mxu0 %v1802
      %v1908 = vpop.f32.mrf.mxu0
      %v1909 = vadd.f32 0.0, %v1908
      %v1910 = vpop.f32.mrf.mxu0
      %v1911 = vadd.f32 0.0, %v1910
      %1912 = vmatmul.bf16.gmra.mxu0 %v1803
      %v1913 = vpop.f32.mrf.mxu0
      %v1914 = vadd.f32 0.0, %v1913
      %v1915 = vpop.f32.mrf.mxu0
      %v1916 = vadd.f32 0.0, %v1915
      %1917 = vdwg.mxu0
      %v1918 = vadd.f32 %v1757, %v1879
      %v1919 = vadd.f32 %v1759, %v1881
      %v1920 = vadd.f32 %v1762, %v1884
      %v1921 = vadd.f32 %v1764, %v1886
      %v1922 = vadd.f32 %v1767, %v1889
      %v1923 = vadd.f32 %v1769, %v1891
      %v1924 = vadd.f32 %v1772, %v1894
      %v1925 = vadd.f32 %v1774, %v1896
      %v1926 = vadd.f32 %v1777, %v1899
      %v1927 = vadd.f32 %v1779, %v1901
      %v1928 = vadd.f32 %v1782, %v1904
      %v1929 = vadd.f32 %v1784, %v1906
      %v1930 = vadd.f32 %v1787, %v1909
      %v1931 = vadd.f32 %v1789, %v1911
      %v1932 = vadd.f32 %v1792, %v1914
      %v1933 = vadd.f32 %v1794, %v1916
      %v1934 = vld [vmem:[%s2 + $0x2] sm:$0x1]
      %v1935 = vperm.slane %v1934, 0
      %v1936 = vadd.f32 %v1918, %v1935
      %v1937 = vadd.f32 %v1919, %v1935
      %v1938 = vadd.f32 %v1920, %v1935
      %v1939 = vadd.f32 %v1921, %v1935
      %v1940 = vadd.f32 %v1922, %v1935
      %v1941 = vadd.f32 %v1923, %v1935
      %v1942 = vadd.f32 %v1924, %v1935
      %v1943 = vadd.f32 %v1925, %v1935
      %v1944 = vadd.f32 %v1926, %v1935
      %v1945 = vadd.f32 %v1927, %v1935
      %v1946 = vadd.f32 %v1928, %v1935
      %v1947 = vadd.f32 %v1929, %v1935
      %v1948 = vadd.f32 %v1930, %v1935
      %v1949 = vadd.f32 %v1931, %v1935
      %v1950 = vadd.f32 %v1932, %v1935
      %v1951 = vadd.f32 %v1933, %v1935
      %v1952 = vadd.f32 %v1936, %v174
      %v1953 = vadd.f32 %v1937, %v175
      %v1954 = vadd.f32 %v1938, %v176
      %v1955 = vadd.f32 %v1939, %v177
      %v1956 = vadd.f32 %v1940, %v178
      %v1957 = vadd.f32 %v1941, %v179
      %v1958 = vadd.f32 %v1942, %v180
      %v1959 = vadd.f32 %v1943, %v181
      %v1960 = vadd.f32 %v1944, %v182
      %v1961 = vadd.f32 %v1945, %v183
      %v1962 = vadd.f32 %v1946, %v184
      %v1963 = vadd.f32 %v1947, %v185
      %v1964 = vadd.f32 %v1948, %v186
      %v1965 = vadd.f32 %v1949, %v187
      %v1966 = vadd.f32 %v1950, %v188
      %v1967 = vadd.f32 %v1951, %v189
      %1968 = vst [vmem:[%s172] sm:$0xff] %v1952
      %1969 = vst [vmem:[%s172 + $0x8] sm:$0xff] %v1953
      %1970 = vst [vmem:[%s172 + $0x10] sm:$0xff] %v1954
      %1971 = vst [vmem:[%s172 + $0x18] sm:$0xff] %v1955
      %1972 = vst [vmem:[%s172 + $0x20] sm:$0xff] %v1956
      %1973 = vst [vmem:[%s172 + $0x28] sm:$0xff] %v1957
      %1974 = vst [vmem:[%s172 + $0x30] sm:$0xff] %v1958
      %1975 = vst [vmem:[%s172 + $0x38] sm:$0xff] %v1959
      %1976 = vst [vmem:[%s172 + $0x40] sm:$0xff] %v1960
      %1977 = vst [vmem:[%s172 + $0x48] sm:$0xff] %v1961
      %1978 = vst [vmem:[%s172 + $0x50] sm:$0xff] %v1962
      %1979 = vst [vmem:[%s172 + $0x58] sm:$0xff] %v1963
      %1980 = vst [vmem:[%s172 + $0x60] sm:$0xff] %v1964
      %1981 = vst [vmem:[%s172 + $0x68] sm:$0xff] %v1965
      %1982 = vst [vmem:[%s172 + $0x70] sm:$0xff] %v1966
      %1983 = vst [vmem:[%s172 + $0x78] sm:$0xff] %v1967
      %s1984 = smul.u32 16, %s14
      %p1985 = scmp.lt.s32.totalorder %s1984, 63
      %s1986 = scalar_select %p1985, %s1984, 63
      %s1987 = smul.addr %s1986, 8
      %s1988 = scalar_lea.vmem %s3, %s1987
      // Predicated region
      $region33: #{basic_block.1} parent=31 // pred_check
        %p1989 = pneg %p100
      $region34: #{basic_block.1} parent=31 // pred_check_branch
        %1991 = sbr.rel (%p1989) target = $region36
      $region35: #{basic_block.1} parent=31 // pred_region
        %s1992 = smul.u32 16, %s14
      $region36: #{basic_block.1} parent=31 // pred_fallthru
        _
    $region32: #{basic_block.1} parent=5 // pred_fallthru
      _
    %p1993 = scmp.le.s32.totalorder 2, %s9
    // Predicated region
    $region37: #{basic_block.1} parent=5 // pred_check
      %p1994 = pneg %p1993
    $region38: #{basic_block.1} parent=5 // pred_check_branch
      %1996 = sbr.rel (%p1994) target = $region40
    $region39: #{basic_block.1} parent=5 // pred_region
      %s1997 = ssub.s32 %s9, 2
      // Predicated region
      $region41: #{basic_block.1} parent=39 // pred_check
        %p1998 = pneg %p106
      $region42: #{basic_block.1} parent=39 // pred_check_branch
        %2000 = sbr.rel (%p1998) target = $region44
      $region43: #{basic_block.1} parent=39 // pred_region
        %s2001 = smul.u32 16, %s15
        %p2002 = scmp.lt.s32.totalorder %s2001, 63
        %s2003 = scalar_select %p2002, %s2001, 63
        %s2004 = smul.addr %s2003, 8
        %s2005 = scalar_lea.vmem %s3, %s2004
      $region44: #{basic_block.1} parent=39 // pred_fallthru
        _
    $region40: #{basic_block.1} parent=5 // pred_fallthru
      _
  $region6: #{basic_block.1} parent=0 // loop_footer
    %s13 = sadd.s32 1, %s9
  $region7: #{basic_block.1} parent=0 // loop_footer_branch
    %8 = sbr.rel target = $region3
  $region8: #{basic_block.1} parent=0 // loop_exit
    _

</llo_original>
